<compile_context>
chip_gen: v6e
topology: v6e:2x2x1
jax: 0.10.0
libtpu: 0.0.40
codegen_flags: <defaults>
</compile_context>

<pallas_src>
import functools

import jax
import jax.numpy as jnp
import numpy as np
from jax.experimental import pallas as pl
from jax.experimental.pallas import tpu as pltpu


# ----------------------------------------------------------------------------
# Pallas kernel: grid = (token_tiles, groups, I_tiles); y accumulated over
# (group, I) for each token tile.
# ----------------------------------------------------------------------------
def _fused_moe_kernel(
    active_ref,   # SMEM (G,) int32  : 1 if group received any routed token
    hs_ref,       # (tB, H)    fp32  : token activations
    scalar_ref,   # (1, tB, 1) fp32  : total routed weight of this group per token
    gw_ref,       # (1, tB, NF) fp32 : softmax-normalized within-group weights
    gwe2_ref,     # (1, tB, 2*KR) fp32 : [gw repeated over rank | same again]
    maskW_ref,    # (1, NF, H)  bf16 : mask_up_proj weight, transposed
    guWt_ref,     # (1, H, 2*tI) bf16: [gate|up] base weights, I-tile interleaved
    guA_ref,      # (1, H, 2*KR) bf16: [gate adapter A | up adapter A]
    guB_ref,      # (1, 2*KR, 2*tI) bf16: block-diag [gate B ; up B], I-tile interleaved
    dWt_ref,      # (1, tI, H)  bf16 : down base weight (transposed), I-tiled
    dA_ref,       # (1, tI, KR) bf16 : down adapter A, I-tiled
    dB_ref,       # (1, KR, H)  bf16 : down adapter B (scaling folded in)
    y_ref,        # (tB, H)    fp32  : output accumulator (resident over g, i)
    x_sc,         # (tB, H)    bf16  scratch: mask-adjusted input
    logu_sc,      # (tB, 2*KR) bf16  scratch: (x@guA) * group weights
    lod_sc,       # (tB, KR)   fp32  scratch: accumulated h@dA over I tiles
    *, nf, kr, ti,
):
    g = pl.program_id(1)
    i = pl.program_id(2)
    ni = pl.num_programs(2)

    @pl.when(jnp.logical_and(g == 0, i == 0))
    def _init():
        y_ref[...] = jnp.zeros_like(y_ref)

    @pl.when(active_ref[g] != 0)
    def _compute():
        scalar = scalar_ref[0]                     # (tB, 1) fp32

        @pl.when(i == 0)
        def _prep():
            # x = hidden + mask_up_proj(group weights): K=NF contraction as
            # NF VPU FMAs instead of a padded MXU matmul.
            x = hs_ref[...]                                            # fp32
            gw_blk = gw_ref[0]                                         # (tB, NF)
            maskW = maskW_ref[0].astype(jnp.float32)                   # (NF, H)
            for f in range(nf):
                x = x + gw_blk[:, f:f + 1] * maskW[f:f + 1, :]
            xb = x.astype(jnp.bfloat16)
            x_sc[...] = xb
            # fused gate+up adapter "A" projection (independent of I tile)
            lo = jnp.dot(xb, guA_ref[0], preferred_element_type=jnp.float32)
            logu_sc[...] = (lo * gwe2_ref[0]).astype(jnp.bfloat16)
            lod_sc[...] = jnp.zeros_like(lod_sc)

        # gate+up (base + low-rank) for this I tile, single 2*tI-wide N dim.
        gateup = (
            jnp.dot(x_sc[...], guWt_ref[0], preferred_element_type=jnp.float32)
            + jnp.dot(logu_sc[...], guB_ref[0], preferred_element_type=jnp.float32)
        )                                                              # (tB, 2*tI)
        gate = gateup[:, :ti]
        up = gateup[:, ti:]
        h = (jax.nn.silu(gate) * up).astype(jnp.bfloat16)              # (tB, tI)

        # down-proj base partial for this I tile -> accumulate into y.
        y_ref[...] += scalar * jnp.dot(h, dWt_ref[0],
                                       preferred_element_type=jnp.float32)
        # down adapter "A" partial -> accumulate in scratch across I tiles.
        lod_sc[...] += jnp.dot(h, dA_ref[0], preferred_element_type=jnp.float32)

        @pl.when(i == ni - 1)
        def _final():
            gwe = gwe2_ref[0][:, :kr]                                  # (tB, KR)
            lora_in = (lod_sc[...] * gwe).astype(jnp.bfloat16)
            y_ref[...] += scalar * jnp.dot(lora_in, dB_ref[0],
                                           preferred_element_type=jnp.float32)


def _pick_tile(n, candidates):
    for c in candidates:
        if c <= n and n % c == 0:
            return c
    return n


def fused_moe_pallas(hs2d, scalar, gw, gwe2, active, packed, *, rank,
                     tile_b=None, tile_i=None):
    """hs2d: (B, H). scalar/gw/gwe2: (G, B, *). active: (G,). packed: bf16 weights."""
    B, H = hs2d.shape
    G, _, NF = gw.shape
    KR = NF * rank
    I = packed["dWt"].shape[1]

    if tile_b is None:
        tile_b = _pick_tile(B, (256, 128, 64, 32, 16, 8))
    if tile_i is None:
        tile_i = _pick_tile(I, (512, 256, 128))
    assert B % tile_b == 0 and I % tile_i == 0
    nT, nI = B // tile_b, I // tile_i

    in_specs = [
        pl.BlockSpec((tile_b, H),          lambda t, g, i, a: (t, 0)),      # hs
        pl.BlockSpec((1, tile_b, 1),       lambda t, g, i, a: (g, t, 0)),   # scalar
        pl.BlockSpec((1, tile_b, NF),      lambda t, g, i, a: (g, t, 0)),   # gw
        pl.BlockSpec((1, tile_b, 2 * KR),  lambda t, g, i, a: (g, t, 0)),   # gwe2
        pl.BlockSpec((1, NF, H),           lambda t, g, i, a: (g, 0, 0)),   # maskWt
        pl.BlockSpec((1, H, 2 * tile_i),   lambda t, g, i, a: (g, 0, i)),   # guWt
        pl.BlockSpec((1, H, 2 * KR),       lambda t, g, i, a: (g, 0, 0)),   # guA
        pl.BlockSpec((1, 2 * KR, 2 * tile_i), lambda t, g, i, a: (g, 0, i)),  # guB
        pl.BlockSpec((1, tile_i, H),       lambda t, g, i, a: (g, i, 0)),   # dWt
        pl.BlockSpec((1, tile_i, KR),      lambda t, g, i, a: (g, i, 0)),   # dA
        pl.BlockSpec((1, KR, H),           lambda t, g, i, a: (g, 0, 0)),   # dB
    ]
    out_specs = pl.BlockSpec((tile_b, H), lambda t, g, i, a: (t, 0))

    kernel = functools.partial(_fused_moe_kernel, nf=NF, kr=KR, ti=tile_i)

    return pl.pallas_call(
        kernel,
        out_shape=jax.ShapeDtypeStruct((B, H), jnp.float32),
        grid_spec=pltpu.PrefetchScalarGridSpec(
            num_scalar_prefetch=1,              # 'active' flags in SMEM
            grid=(nT, G, nI),
            in_specs=in_specs,
            out_specs=out_specs,
            scratch_shapes=[
                pltpu.VMEM((tile_b, H), jnp.bfloat16),       # x_sc
                pltpu.VMEM((tile_b, 2 * KR), jnp.bfloat16),  # logu_sc
                pltpu.VMEM((tile_b, KR), jnp.float32),       # lod_sc
            ],
        ),
        compiler_params=pltpu.CompilerParams(
            # token axis sharded across TensorCores; group & I axes accumulate.
            dimension_semantics=("parallel", "arbitrary", "arbitrary"),
            vmem_limit_bytes=48 * 1024 * 1024,
        ),
    )(
        active, hs2d, scalar, gw, gwe2,
        packed["maskWt"], packed["guWt"], packed["guA"], packed["guB"],
        packed["dWt"], packed["dA"], packed["dB"],
    )


# ----------------------------------------------------------------------------
# Glue: routing and parameter packing (plain JAX).
# ----------------------------------------------------------------------------
def compute_routing(hs2d, topk_idx, topk_weight, inv_mapping, rank):
    # flat_w[g, b, i] = sum_k topk_weight[b,k] * (topk_idx[b,k] == inv_mapping[g,i])
    match = (topk_idx[None, :, None, :] == inv_mapping[:, None, :, None])
    flat_w = jnp.sum(topk_weight[None, :, None, :] * match, axis=-1)   # (G, B, NF)
    scalar = jnp.sum(flat_w, axis=-1, keepdims=True)                    # (G, B, 1)
    masked = jnp.where(flat_w == 0.0, -1e9, flat_w)
    gw = jax.nn.softmax(masked, axis=-1)                                # (G, B, NF)
    gwe = jnp.repeat(gw, rank, axis=-1)                                 # (G, B, NF*R), k-major
    gwe2 = jnp.concatenate([gwe, gwe], axis=-1)                         # (G, B, 2*NF*R)
    active = (jnp.sum(scalar, axis=(1, 2)) > 0).astype(jnp.int32)       # (G,)
    return scalar, gw, gwe2, active


def pack_group_params(group_params, tile_i, dtype=jnp.bfloat16):
    """Pre-transpose / fuse / interleave weights so the kernel only does x @ W.
    Scaling factors folded into the adapter-B matrices (linear, exact)."""
    def flat_qa(qa):            # (NF, R, IN) -> (IN, NF*R), k-major columns
        nf, r, ind = qa.shape
        return qa.reshape(nf * r, ind).T

    def flat_qb(qb, s):         # (NF, OUT, R) -> (NF*R, OUT) * scaling
        nf, out, r = qb.shape
        return jnp.transpose(qb, (0, 2, 1)).reshape(nf * r, out) * s[None, :]

    def interleave_gu(gWt, uWt):
        # (H, I) x 2 -> (H, 2I): per I-tile layout [gate_tile | up_tile]
        Hd, Id = gWt.shape
        ni = Id // tile_i
        g = gWt.reshape(Hd, ni, tile_i)
        u = uWt.reshape(Hd, ni, tile_i)
        return jnp.stack([g, u], axis=2).reshape(Hd, 2 * Id)

    def blockdiag_guB(gB, uB):
        # (KR, I) x 2 -> (2*KR, 2I): rows 0:KR feed gate lanes, KR: feed up lanes
        KR, Id = gB.shape
        ni = Id // tile_i
        g = gB.reshape(KR, ni, tile_i)
        u = uB.reshape(KR, ni, tile_i)
        z = jnp.zeros_like(g)
        top = jnp.stack([g, z], axis=2)
        bot = jnp.stack([z, u], axis=2)
        return jnp.concatenate([top, bot], axis=0).reshape(2 * KR, 2 * Id)

    maskWt, guWt, guA, guB, dWt, dA, dB = [], [], [], [], [], [], []
    for p in group_params:
        gWt_, uWt_ = p["gate_W"].T, p["up_W"].T
        gA_, uA_ = flat_qa(p["gate_qa"]), flat_qa(p["up_qa"])
        gB_, uB_ = flat_qb(p["gate_qb"], p["gate_s"]), flat_qb(p["up_qb"], p["up_s"])
        maskWt.append(p["mask_W"].T)
        guWt.append(interleave_gu(gWt_, uWt_))
        guA.append(jnp.concatenate([gA_, uA_], axis=1))
        guB.append(blockdiag_guB(gB_, uB_))
        dWt.append(p["down_W"].T)
        dA.append(flat_qa(p["down_qa"]))
        dB.append(flat_qb(p["down_qb"], p["down_s"]))

    pk = lambda xs: jnp.stack(xs).astype(dtype)
    return {"maskWt": pk(maskWt), "guWt": pk(guWt), "guA": pk(guA), "guB": pk(guB),
            "dWt": pk(dWt), "dA": pk(dA), "dB": pk(dB)}


# ----------------------------------------------------------------------------
# Pure-JAX reference (mirrors the PyTorch module exactly) for validation.
# ----------------------------------------------------------------------------
def _fused_linear_ref(x, W, qa, qb, scaling, gw):
    out = x @ W.T
    a = jnp.einsum('bh,krh->bkr', x, qa)
    b = jnp.einsum('bkr,khr->bkh', a, qb)
    b = jnp.einsum('bkh,bk->bkh', b, gw)
    lora = jnp.sum(b, axis=1)
    return out + scaling[None] * lora


def _fused_mlp_ref(x, gw, p):
    x = x + gw @ p["mask_W"].T
    g = _fused_linear_ref(x, p["gate_W"], p["gate_qa"], p["gate_qb"], p["gate_s"], gw)
    u = _fused_linear_ref(x, p["up_W"], p["up_qa"], p["up_qb"], p["up_s"], gw)
    h = jax.nn.silu(g) * u
    return _fused_linear_ref(h, p["down_W"], p["down_qa"], p["down_qb"], p["down_s"], gw)


def _moe_ref(hs2d, topk_idx, topk_weight, inv_mapping, group_params):
    y = jnp.zeros_like(hs2d)
    for g in range(inv_mapping.shape[0]):
        idxs = inv_mapping[g]
        flat = jnp.stack(
            [jnp.sum(topk_weight * (topk_idx == idx), axis=-1) for idx in idxs],
            axis=-1)
        scalar = jnp.sum(flat, axis=-1, keepdims=True)
        flat = jnp.where(flat == 0.0, -1e9, flat)
        gw = jax.nn.softmax(flat, axis=-1)
        out = _fused_mlp_ref(hs2d, gw, group_params[g])
        y = y + scalar * out
    return y


if __name__ == "__main__":
    # Small, TPU-friendly shapes.
    BATCH, SEQ, H = 2, 8, 128          # hidden_size = 128
    I = 128                            # moe_intermediate_size
    NF = 2                             # group_size / n_fused
    RANK = 8
    G = 2                              # number of fused-expert groups
    E = G * NF                         # total experts
    K = 2                              # num_experts_per_tok
    B = BATCH * SEQ

    key = jax.random.PRNGKey(0)
    ks = iter(jax.random.split(key, 64))

    hidden_states = jax.random.normal(next(ks), (BATCH, SEQ, H), dtype=jnp.float32)

    # Gate (external module in the original code): simple softmax top-k router.
    # TODO(synk): the gate / shared_experts modules are external to FusedMOE;
    # implemented here in plain JAX glue (n_shared_experts=None).
    gate_W = jax.random.normal(next(ks), (E, H), dtype=jnp.float32) * 0.02
    hs2d = hidden_states.reshape(-1, H)
    scores = jax.nn.softmax(hs2d @ gate_W.T, axis=-1)
    topk_weight, topk_idx = jax.lax.top_k(scores, K)

    # inv_mapping_dict buffer: which original experts each fused group covers.
    inv_mapping = jnp.array([[0, 1], [2, 3]], dtype=jnp.int32)

    # Deterministic synthetic fused-expert parameters (mixture adapter type).
    def make_group_params():
        return {
            "mask_W":  jax.random.normal(next(ks), (H, NF), jnp.float32) * 0.02,
            "gate_W":  jax.random.normal(next(ks), (I, H), jnp.float32) * 0.02,
            "gate_qa": jax.random.normal(next(ks), (NF, RANK, H), jnp.float32) * 0.02,
            "gate_qb": jax.random.normal(next(ks), (NF, I, RANK), jnp.float32) * 0.02,
            "gate_s":  jnp.full((I,), 0.1, jnp.float32),
            "up_W":    jax.random.normal(next(ks), (I, H), jnp.float32) * 0.02,
            "up_qa":   jax.random.normal(next(ks), (NF, RANK, H), jnp.float32) * 0.02,
            "up_qb":   jax.random.normal(next(ks), (NF, I, RANK), jnp.float32) * 0.02,
            "up_s":    jnp.full((I,), 0.1, jnp.float32),
            "down_W":  jax.random.normal(next(ks), (H, I), jnp.float32) * 0.02,
            "down_qa": jax.random.normal(next(ks), (NF, RANK, I), jnp.float32) * 0.02,
            "down_qb": jax.random.normal(next(ks), (NF, H, RANK), jnp.float32) * 0.02,
            "down_s":  jnp.full((H,), 0.1, jnp.float32),
        }

    group_params = [make_group_params() for _ in range(G)]

    # Tile choices (tI=128, tB=16 at these toy shapes; larger at real shapes).
    tile_i = _pick_tile(I, (512, 256, 128))
    tile_b = _pick_tile(B, (256, 128, 64, 32, 16, 8))

    # Routing glue + packed bf16 weights.
    scalar, gw, gwe2, active = compute_routing(hs2d, topk_idx, topk_weight,
                                               inv_mapping, RANK)
    packed = pack_group_params(group_params, tile_i)

    # Pallas kernel forward.
    y2d = fused_moe_pallas(hs2d, scalar, gw, gwe2, active, packed,
                           rank=RANK, tile_b=tile_b, tile_i=tile_i)
    y = y2d.reshape(hidden_states.shape)
    jax.block_until_ready(y)

    # Validate against the pure-JAX fp32 reference of the PyTorch semantics
    # (tolerances loosened for bf16 weights/activations in the kernel).
    y_ref = _moe_ref(hs2d, topk_idx, topk_weight, inv_mapping, group_params)
    y_ref = y_ref.reshape(hidden_states.shape)
    np.testing.assert_allclose(np.asarray(y), np.asarray(y_ref),
                               rtol=5e-2, atol=5e-3)

    print("KERNEL_OK")
</pallas_src>

<mosaic_0001>
module attributes {stable_mosaic.version = 11 : i64} {
  func.func @_fused_moe_kernel(%arg0: i32, %arg1: i32, %arg2: i32, %arg3: memref<2xi32, #tpu.memory_space<smem>>, %arg4: memref<16x128xf32, #tpu.memory_space<vmem>>, %arg5: memref<1x16x1xf32, #tpu.memory_space<vmem>>, %arg6: memref<1x16x2xf32, #tpu.memory_space<vmem>>, %arg7: memref<1x16x32xf32, #tpu.memory_space<vmem>>, %arg8: memref<1x2x128xbf16, #tpu.memory_space<vmem>>, %arg9: memref<1x128x256xbf16, #tpu.memory_space<vmem>>, %arg10: memref<1x128x32xbf16, #tpu.memory_space<vmem>>, %arg11: memref<1x32x256xbf16, #tpu.memory_space<vmem>>, %arg12: memref<1x128x128xbf16, #tpu.memory_space<vmem>>, %arg13: memref<1x128x16xbf16, #tpu.memory_space<vmem>>, %arg14: memref<1x16x128xbf16, #tpu.memory_space<vmem>>, %arg15: memref<16x128xf32, #tpu.memory_space<vmem>>, %arg16: memref<16x128xbf16, #tpu.memory_space<vmem>>, %arg17: memref<16x32xbf16, #tpu.memory_space<vmem>>, %arg18: memref<16x16xf32, #tpu.memory_space<vmem>>) attributes {dimension_semantics = [#tpu.dimension_semantics<parallel>, #tpu.dimension_semantics<arbitrary>, #tpu.dimension_semantics<arbitrary>], iteration_bounds = array<i64: 1, 2, 1>, scalar_prefetch = 1 : i64, scratch_operands = 3 : i64, tpu.core_type = #tpu.core_type<tc>, window_params = [{transform_indices = @transform_0, window_bounds = array<i64: 16, 128>}, {transform_indices = @transform_1, window_bounds = array<i64: 1, 16, 1>}, {transform_indices = @transform_2, window_bounds = array<i64: 1, 16, 2>}, {transform_indices = @transform_3, window_bounds = array<i64: 1, 16, 32>}, {transform_indices = @transform_4, window_bounds = array<i64: 1, 2, 128>}, {transform_indices = @transform_5, window_bounds = array<i64: 1, 128, 256>}, {transform_indices = @transform_6, window_bounds = array<i64: 1, 128, 32>}, {transform_indices = @transform_7, window_bounds = array<i64: 1, 32, 256>}, {transform_indices = @transform_8, window_bounds = array<i64: 1, 128, 128>}, {transform_indices = @transform_9, window_bounds = array<i64: 1, 128, 16>}, {transform_indices = @transform_10, window_bounds = array<i64: 1, 16, 128>}, {transform_indices = @transform_11, window_bounds = array<i64: 16, 128>}]} {
    %c0_i32 = arith.constant 0 : i32
    %0 = arith.cmpi eq, %arg1, %c0_i32 : i32
    %c0_i32_0 = arith.constant 0 : i32
    %1 = arith.cmpi eq, %arg2, %c0_i32_0 : i32
    %2 = arith.andi %0, %1 : i1
    %3 = arith.extui %2 : i1 to i32
    %c0_i32_1 = arith.constant 0 : i32
    %4 = arith.cmpi ne, %3, %c0_i32_1 : i32
    scf.if %4 {
      %cst = arith.constant 0.000000e+00 : f32
      %10 = vector.broadcast %cst : f32 to vector<16x128xf32>
      %c0 = arith.constant 0 : index
      %c0_4 = arith.constant 0 : index
      %11 = vector.load %arg15[%c0, %c0_4] : memref<16x128xf32, #tpu.memory_space<vmem>>, vector<16x128xf32>
      tpu.vector_store %arg15[%c0, %c0_4], %10 {strides = array<i32>} : memref<16x128xf32, #tpu.memory_space<vmem>>, vector<16x128xf32>,
    } else {
    }
    %5 = arith.index_cast %arg1 : i32 to index
    %6 = memref.load %arg3[%5] : memref<2xi32, #tpu.memory_space<smem>>
    %c0_i32_2 = arith.constant 0 : i32
    %7 = arith.cmpi ne, %6, %c0_i32_2 : i32
    %8 = arith.extui %7 : i1 to i32
    %c0_i32_3 = arith.constant 0 : i32
    %9 = arith.cmpi ne, %8, %c0_i32_3 : i32
    scf.if %9 {
      %c0 = arith.constant 0 : index
      %c0_4 = arith.constant 0 : index
      %c0_5 = arith.constant 0 : index
      %10 = vector.load %arg5[%c0, %c0_4, %c0_5] : memref<1x16x1xf32, #tpu.memory_space<vmem>>, vector<1x16x1xf32>
      %11 = vector.shape_cast %10 : vector<1x16x1xf32> to vector<16x1xf32>
      %c0_i32_6 = arith.constant 0 : i32
      %12 = arith.cmpi eq, %arg2, %c0_i32_6 : i32
      %13 = arith.extui %12 : i1 to i32
      %c0_i32_7 = arith.constant 0 : i32
      %14 = arith.cmpi ne, %13, %c0_i32_7 : i32
      scf.if %14 {
        %c0_38 = arith.constant 0 : index
        %c0_39 = arith.constant 0 : index
        %51 = vector.load %arg4[%c0_38, %c0_39] : memref<16x128xf32, #tpu.memory_space<vmem>>, vector<16x128xf32>
        %c0_40 = arith.constant 0 : index
        %c0_41 = arith.constant 0 : index
        %c0_42 = arith.constant 0 : index
        %52 = vector.load %arg6[%c0_40, %c0_41, %c0_42] : memref<1x16x2xf32, #tpu.memory_space<vmem>>, vector<1x16x2xf32>
        %53 = vector.shape_cast %52 : vector<1x16x2xf32> to vector<16x2xf32>
        %c0_43 = arith.constant 0 : index
        %c0_44 = arith.constant 0 : index
        %c0_45 = arith.constant 0 : index
        %54 = vector.load %arg8[%c0_43, %c0_44, %c0_45] : memref<1x2x128xbf16, #tpu.memory_space<vmem>>, vector<1x2x128xbf16>
        %55 = vector.shape_cast %54 : vector<1x2x128xbf16> to vector<2x128xbf16>
        %56 = arith.extf %55 : vector<2x128xbf16> to vector<2x128xf32>
        %57 = vector.extract_strided_slice %53 {offsets = [0, 0], sizes = [16, 1], strides = [1, 1]} : vector<16x2xf32> to vector<16x1xf32>
        %58 = vector.extract_strided_slice %56 {offsets = [0, 0], sizes = [1, 128], strides = [1, 1]} : vector<2x128xf32> to vector<1x128xf32>
        %59 = vector.broadcast %57 : vector<16x1xf32> to vector<16x128xf32>
        %60 = vector.broadcast %58 : vector<1x128xf32> to vector<16x128xf32>
        %61 = arith.mulf %59, %60 : vector<16x128xf32>
        %62 = arith.addf %51, %61 : vector<16x128xf32>
        %63 = vector.extract_strided_slice %53 {offsets = [0, 1], sizes = [16, 1], strides = [1, 1]} : vector<16x2xf32> to vector<16x1xf32>
        %64 = vector.extract_strided_slice %56 {offsets = [1, 0], sizes = [1, 128], strides = [1, 1]} : vector<2x128xf32> to vector<1x128xf32>
        %65 = vector.broadcast %63 : vector<16x1xf32> to vector<16x128xf32>
        %66 = vector.broadcast %64 : vector<1x128xf32> to vector<16x128xf32>
        %67 = arith.mulf %65, %66 : vector<16x128xf32>
        %68 = arith.addf %62, %67 : vector<16x128xf32>
        %69 = arith.truncf %68 : vector<16x128xf32> to vector<16x128xbf16>
        %c0_46 = arith.constant 0 : index
        %c0_47 = arith.constant 0 : index
        %70 = vector.load %arg16[%c0_46, %c0_47] : memref<16x128xbf16, #tpu.memory_space<vmem>>, vector<16x128xbf16>
        tpu.vector_store %arg16[%c0_46, %c0_47], %69 {strides = array<i32>} : memref<16x128xbf16, #tpu.memory_space<vmem>>, vector<16x128xbf16>,
        %c0_48 = arith.constant 0 : index
        %c0_49 = arith.constant 0 : index
        %c0_50 = arith.constant 0 : index
        %71 = vector.load %arg10[%c0_48, %c0_49, %c0_50] : memref<1x128x32xbf16, #tpu.memory_space<vmem>>, vector<1x128x32xbf16>
        %72 = vector.shape_cast %71 : vector<1x128x32xbf16> to vector<128x32xbf16>
        %cst_51 = arith.constant dense<0.000000e+00> : vector<16x32xf32>
        %73 = tpu.matmul %69, %72, %cst_51 {dimension_numbers = #tpu.dot_dimension_numbers<[1], [0], [0], [1], [0, 0, 1, 1], [], []>} : vector<16x128xbf16>, vector<128x32xbf16>, vector<16x32xf32> -> vector<16x32xf32>
        %c0_52 = arith.constant 0 : index
        %c0_53 = arith.constant 0 : index
        %c0_54 = arith.constant 0 : index
        %74 = vector.load %arg7[%c0_52, %c0_53, %c0_54] : memref<1x16x32xf32, #tpu.memory_space<vmem>>, vector<1x16x32xf32>
        %75 = vector.shape_cast %74 : vector<1x16x32xf32> to vector<16x32xf32>
        %76 = arith.mulf %73, %75 : vector<16x32xf32>
        %77 = arith.truncf %76 : vector<16x32xf32> to vector<16x32xbf16>
        %c0_55 = arith.constant 0 : index
        %c0_56 = arith.constant 0 : index
        %78 = vector.load %arg17[%c0_55, %c0_56] : memref<16x32xbf16, #tpu.memory_space<vmem>>, vector<16x32xbf16>
        tpu.vector_store %arg17[%c0_55, %c0_56], %77 {strides = array<i32>} : memref<16x32xbf16, #tpu.memory_space<vmem>>, vector<16x32xbf16>,
        %cst_57 = arith.constant 0.000000e+00 : f32
        %79 = vector.broadcast %cst_57 : f32 to vector<16x16xf32>
        %c0_58 = arith.constant 0 : index
        %c0_59 = arith.constant 0 : index
        %80 = vector.load %arg18[%c0_58, %c0_59] : memref<16x16xf32, #tpu.memory_space<vmem>>, vector<16x16xf32>
        tpu.vector_store %arg18[%c0_58, %c0_59], %79 {strides = array<i32>} : memref<16x16xf32, #tpu.memory_space<vmem>>, vector<16x16xf32>,
      } else {
      }
      %c0_8 = arith.constant 0 : index
      %c0_9 = arith.constant 0 : index
      %15 = vector.load %arg16[%c0_8, %c0_9] : memref<16x128xbf16, #tpu.memory_space<vmem>>, vector<16x128xbf16>
      %c0_10 = arith.constant 0 : index
      %c0_11 = arith.constant 0 : index
      %c0_12 = arith.constant 0 : index
      %16 = vector.load %arg9[%c0_10, %c0_11, %c0_12] : memref<1x128x256xbf16, #tpu.memory_space<vmem>>, vector<1x128x256xbf16>
      %17 = vector.shape_cast %16 : vector<1x128x256xbf16> to vector<128x256xbf16>
      %cst = arith.constant dense<0.000000e+00> : vector<16x256xf32>
      %18 = tpu.matmul %15, %17, %cst {dimension_numbers = #tpu.dot_dimension_numbers<[1], [0], [0], [1], [0, 0, 1, 1], [], []>} : vector<16x128xbf16>, vector<128x256xbf16>, vector<16x256xf32> -> vector<16x256xf32>
      %c0_13 = arith.constant 0 : index
      %c0_14 = arith.constant 0 : index
      %19 = vector.load %arg17[%c0_13, %c0_14] : memref<16x32xbf16, #tpu.memory_space<vmem>>, vector<16x32xbf16>
      %c0_15 = arith.constant 0 : index
      %c0_16 = arith.constant 0 : index
      %c0_17 = arith.constant 0 : index
      %20 = vector.load %arg11[%c0_15, %c0_16, %c0_17] : memref<1x32x256xbf16, #tpu.memory_space<vmem>>, vector<1x32x256xbf16>
      %21 = vector.shape_cast %20 : vector<1x32x256xbf16> to vector<32x256xbf16>
      %cst_18 = arith.constant dense<0.000000e+00> : vector<16x256xf32>
      %22 = tpu.matmul %19, %21, %cst_18 {dimension_numbers = #tpu.dot_dimension_numbers<[1], [0], [0], [1], [0, 0, 1, 1], [], []>} : vector<16x32xbf16>, vector<32x256xbf16>, vector<16x256xf32> -> vector<16x256xf32>
      %23 = arith.addf %18, %22 : vector<16x256xf32>
      %24 = vector.extract_strided_slice %23 {offsets = [0, 0], sizes = [16, 128], strides = [1, 1]} : vector<16x256xf32> to vector<16x128xf32>
      %25 = vector.extract_strided_slice %23 {offsets = [0, 128], sizes = [16, 128], strides = [1, 1]} : vector<16x256xf32> to vector<16x128xf32>
      %26 = arith.negf %24 : vector<16x128xf32>
      %27 = math.exp %26 : vector<16x128xf32>
      %cst_19 = arith.constant 1.000000e+00 : f32
      %28 = vector.broadcast %cst_19 : f32 to vector<16x128xf32>
      %29 = arith.addf %28, %27 : vector<16x128xf32>
      %30 = arith.divf %28, %29 : vector<16x128xf32>
      %31 = arith.mulf %24, %30 : vector<16x128xf32>
      %32 = arith.mulf %31, %25 : vector<16x128xf32>
      %33 = arith.truncf %32 : vector<16x128xf32> to vector<16x128xbf16>
      %c0_20 = arith.constant 0 : index
      %c0_21 = arith.constant 0 : index
      %34 = vector.load %arg15[%c0_20, %c0_21] : memref<16x128xf32, #tpu.memory_space<vmem>>, vector<16x128xf32>
      %c0_22 = arith.constant 0 : index
      %c0_23 = arith.constant 0 : index
      %c0_24 = arith.constant 0 : index
      %35 = vector.load %arg12[%c0_22, %c0_23, %c0_24] : memref<1x128x128xbf16, #tpu.memory_space<vmem>>, vector<1x128x128xbf16>
      %36 = vector.shape_cast %35 : vector<1x128x128xbf16> to vector<128x128xbf16>
      %cst_25 = arith.constant dense<0.000000e+00> : vector<16x128xf32>
      %37 = tpu.matmul %33, %36, %cst_25 {dimension_numbers = #tpu.dot_dimension_numbers<[1], [0], [0], [1], [0, 0, 1, 1], [], []>} : vector<16x128xbf16>, vector<128x128xbf16>, vector<16x128xf32> -> vector<16x128xf32>
      %38 = vector.broadcast %11 : vector<16x1xf32> to vector<16x128xf32>
      %39 = arith.mulf %38, %37 : vector<16x128xf32>
      %40 = arith.addf %34, %39 : vector<16x128xf32>
      %c0_26 = arith.constant 0 : index
      %c0_27 = arith.constant 0 : index
      %41 = vector.load %arg15[%c0_26, %c0_27] : memref<16x128xf32, #tpu.memory_space<vmem>>, vector<16x128xf32>
      tpu.vector_store %arg15[%c0_26, %c0_27], %40 {strides = array<i32>} : memref<16x128xf32, #tpu.memory_space<vmem>>, vector<16x128xf32>,
      %c0_28 = arith.constant 0 : index
      %c0_29 = arith.constant 0 : index
      %42 = vector.load %arg18[%c0_28, %c0_29] : memref<16x16xf32, #tpu.memory_space<vmem>>, vector<16x16xf32>
      %c0_30 = arith.constant 0 : index
      %c0_31 = arith.constant 0 : index
      %c0_32 = arith.constant 0 : index
      %43 = vector.load %arg13[%c0_30, %c0_31, %c0_32] : memref<1x128x16xbf16, #tpu.memory_space<vmem>>, vector<1x128x16xbf16>
      %44 = vector.shape_cast %43 : vector<1x128x16xbf16> to vector<128x16xbf16>
      %cst_33 = arith.constant dense<0.000000e+00> : vector<16x16xf32>
      %45 = tpu.matmul %33, %44, %cst_33 {dimension_numbers = #tpu.dot_dimension_numbers<[1], [0], [0], [1], [0, 0, 1, 1], [], []>} : vector<16x128xbf16>, vector<128x16xbf16>, vector<16x16xf32> -> vector<16x16xf32>
      %46 = arith.addf %42, %45 : vector<16x16xf32>
      %c0_34 = arith.constant 0 : index
      %c0_35 = arith.constant 0 : index
      %47 = vector.load %arg18[%c0_34, %c0_35] : memref<16x16xf32, #tpu.memory_space<vmem>>, vector<16x16xf32>
      tpu.vector_store %arg18[%c0_34, %c0_35], %46 {strides = array<i32>} : memref<16x16xf32, #tpu.memory_space<vmem>>, vector<16x16xf32>,
      %c0_i32_36 = arith.constant 0 : i32
      %48 = arith.cmpi eq, %arg2, %c0_i32_36 : i32
      %49 = arith.extui %48 : i1 to i32
      %c0_i32_37 = arith.constant 0 : i32
      %50 = arith.cmpi ne, %49, %c0_i32_37 : i32
      scf.if %50 {
        %c0_38 = arith.constant 0 : index
        %c0_39 = arith.constant 0 : index
        %c0_40 = arith.constant 0 : index
        %51 = vector.load %arg7[%c0_38, %c0_39, %c0_40] : memref<1x16x32xf32, #tpu.memory_space<vmem>>, vector<1x16x32xf32>
        %52 = vector.shape_cast %51 : vector<1x16x32xf32> to vector<16x32xf32>
        %53 = vector.extract_strided_slice %52 {offsets = [0, 0], sizes = [16, 16], strides = [1, 1]} : vector<16x32xf32> to vector<16x16xf32>
        %c0_41 = arith.constant 0 : index
        %c0_42 = arith.constant 0 : index
        %54 = vector.load %arg18[%c0_41, %c0_42] : memref<16x16xf32, #tpu.memory_space<vmem>>, vector<16x16xf32>
        %55 = arith.mulf %54, %53 : vector<16x16xf32>
        %56 = arith.truncf %55 : vector<16x16xf32> to vector<16x16xbf16>
        %c0_43 = arith.constant 0 : index
        %c0_44 = arith.constant 0 : index
        %57 = vector.load %arg15[%c0_43, %c0_44] : memref<16x128xf32, #tpu.memory_space<vmem>>, vector<16x128xf32>
        %c0_45 = arith.constant 0 : index
        %c0_46 = arith.constant 0 : index
        %c0_47 = arith.constant 0 : index
        %58 = vector.load %arg14[%c0_45, %c0_46, %c0_47] : memref<1x16x128xbf16, #tpu.memory_space<vmem>>, vector<1x16x128xbf16>
        %59 = vector.shape_cast %58 : vector<1x16x128xbf16> to vector<16x128xbf16>
        %cst_48 = arith.constant dense<0.000000e+00> : vector<16x128xf32>
        %60 = tpu.matmul %56, %59, %cst_48 {dimension_numbers = #tpu.dot_dimension_numbers<[1], [0], [0], [1], [0, 0, 1, 1], [], []>} : vector<16x16xbf16>, vector<16x128xbf16>, vector<16x128xf32> -> vector<16x128xf32>
        %61 = vector.broadcast %11 : vector<16x1xf32> to vector<16x128xf32>
        %62 = arith.mulf %61, %60 : vector<16x128xf32>
        %63 = arith.addf %57, %62 : vector<16x128xf32>
        %c0_49 = arith.constant 0 : index
        %c0_50 = arith.constant 0 : index
        %64 = vector.load %arg15[%c0_49, %c0_50] : memref<16x128xf32, #tpu.memory_space<vmem>>, vector<16x128xf32>
        tpu.vector_store %arg15[%c0_49, %c0_50], %63 {strides = array<i32>} : memref<16x128xf32, #tpu.memory_space<vmem>>, vector<16x128xf32>,
      } else {
      }
    } else {
    }
    return
  }
  func.func @transform_0(%arg0: i32, %arg1: i32, %arg2: i32, %arg3: memref<2xi32, #tpu.memory_space<smem>>) -> (i32, i32) {
    %c0_i32 = arith.constant 0 : i32
    %c0_i32_0 = arith.constant 0 : i32
    return %arg0, %c0_i32 : i32, i32
  }
  func.func @transform_1(%arg0: i32, %arg1: i32, %arg2: i32, %arg3: memref<2xi32, #tpu.memory_space<smem>>) -> (i32, i32, i32) {
    %c0_i32 = arith.constant 0 : i32
    %c0_i32_0 = arith.constant 0 : i32
    return %arg1, %arg0, %c0_i32 : i32, i32, i32
  }
  func.func @transform_2(%arg0: i32, %arg1: i32, %arg2: i32, %arg3: memref<2xi32, #tpu.memory_space<smem>>) -> (i32, i32, i32) {
    %c0_i32 = arith.constant 0 : i32
    %c0_i32_0 = arith.constant 0 : i32
    return %arg1, %arg0, %c0_i32 : i32, i32, i32
  }
  func.func @transform_3(%arg0: i32, %arg1: i32, %arg2: i32, %arg3: memref<2xi32, #tpu.memory_space<smem>>) -> (i32, i32, i32) {
    %c0_i32 = arith.constant 0 : i32
    %c0_i32_0 = arith.constant 0 : i32
    return %arg1, %arg0, %c0_i32 : i32, i32, i32
  }
  func.func @transform_4(%arg0: i32, %arg1: i32, %arg2: i32, %arg3: memref<2xi32, #tpu.memory_space<smem>>) -> (i32, i32, i32) {
    %c0_i32 = arith.constant 0 : i32
    %c0_i32_0 = arith.constant 0 : i32
    %c0_i32_1 = arith.constant 0 : i32
    return %arg1, %c0_i32, %c0_i32_0 : i32, i32, i32
  }
  func.func @transform_5(%arg0: i32, %arg1: i32, %arg2: i32, %arg3: memref<2xi32, #tpu.memory_space<smem>>) -> (i32, i32, i32) {
    %c0_i32 = arith.constant 0 : i32
    %c0_i32_0 = arith.constant 0 : i32
    return %arg1, %c0_i32, %arg2 : i32, i32, i32
  }
  func.func @transform_6(%arg0: i32, %arg1: i32, %arg2: i32, %arg3: memref<2xi32, #tpu.memory_space<smem>>) -> (i32, i32, i32) {
    %c0_i32 = arith.constant 0 : i32
    %c0_i32_0 = arith.constant 0 : i32
    %c0_i32_1 = arith.constant 0 : i32
    return %arg1, %c0_i32, %c0_i32_0 : i32, i32, i32
  }
  func.func @transform_7(%arg0: i32, %arg1: i32, %arg2: i32, %arg3: memref<2xi32, #tpu.memory_space<smem>>) -> (i32, i32, i32) {
    %c0_i32 = arith.constant 0 : i32
    %c0_i32_0 = arith.constant 0 : i32
    return %arg1, %c0_i32, %arg2 : i32, i32, i32
  }
  func.func @transform_8(%arg0: i32, %arg1: i32, %arg2: i32, %arg3: memref<2xi32, #tpu.memory_space<smem>>) -> (i32, i32, i32) {
    %c0_i32 = arith.constant 0 : i32
    %c0_i32_0 = arith.constant 0 : i32
    return %arg1, %arg2, %c0_i32 : i32, i32, i32
  }
  func.func @transform_9(%arg0: i32, %arg1: i32, %arg2: i32, %arg3: memref<2xi32, #tpu.memory_space<smem>>) -> (i32, i32, i32) {
    %c0_i32 = arith.constant 0 : i32
    %c0_i32_0 = arith.constant 0 : i32
    return %arg1, %arg2, %c0_i32 : i32, i32, i32
  }
  func.func @transform_10(%arg0: i32, %arg1: i32, %arg2: i32, %arg3: memref<2xi32, #tpu.memory_space<smem>>) -> (i32, i32, i32) {
    %c0_i32 = arith.constant 0 : i32
    %c0_i32_0 = arith.constant 0 : i32
    %c0_i32_1 = arith.constant 0 : i32
    return %arg1, %c0_i32, %c0_i32_0 : i32, i32, i32
  }
  func.func @transform_11(%arg0: i32, %arg1: i32, %arg2: i32, %arg3: memref<2xi32, #tpu.memory_space<smem>>) -> (i32, i32) {
    %c0_i32 = arith.constant 0 : i32
    %c0_i32_0 = arith.constant 0 : i32
    return %arg0, %c0_i32 : i32, i32
  }
}

</mosaic_0001>

<llo_original>
// kernel: tpu_custom_call.1
$region0: #{tpu_custom_call.1}
  #allocation0 [shape = 'u32[]', space=smem, size = 0x4, offset = 0x4, fixed_abs, tag = 'smem constant byte address 0x4 - core index']
  #allocation1 [shape = 'u32[144,128]{1,0:T(1,128)}', space=vmem, size = 0x12000, scoped, tag = 'internal scratch']
  #allocation2 [shape = 'bf16[16,128]{1,0:T(8,128)(2,1)}', space=vmem, size = 0x1000, scoped, tag = 'scratch operand']
  #allocation3 [shape = 'bf16[16,32]{1,0:T(8,128)(2,1)}', space=vmem, size = 0x1000, scoped, tag = 'scratch operand']
  #allocation4 [shape = 'f32[16,16]{1,0:T(8,128)}', space=vmem, size = 0x2000, scoped, tag = 'scratch operand']
  #allocation5 [shape = 's32[1]{0}', space=sflag, size = 0x4, scoped, tag = 'scoped memory for tpu_custom_call.1']
  #allocation6 [shape = 'u8[512]{0}', space=smem, size = 0x200, scoped, tag = 'prefetched SMEM operand 0']
  %s0 = inlined_call_operand.hbm [shape: s32[2], index: 0, kind: input, shape index: {}]
  %s1 = inlined_call_operand.hbm [shape: f32[16,128], index: 1, kind: input, shape index: {}]
  %s2 = inlined_call_operand.vmem [shape: f32[2,16,1], index: 2, kind: input, shape index: {}]
  %s3 = inlined_call_operand.vmem [shape: f32[2,16,2], index: 3, kind: input, shape index: {}]
  %s4 = inlined_call_operand.hbm [shape: f32[2,16,32], index: 4, kind: input, shape index: {}]
  %s5 = inlined_call_operand.hbm [shape: bf16[2,2,128], index: 5, kind: input, shape index: {}]
  %s6 = inlined_call_operand.vmem [shape: bf16[2,128,256], index: 6, kind: input, shape index: {}]
  %s7 = inlined_call_operand.vmem [shape: bf16[2,128,32], index: 7, kind: input, shape index: {}]
  %s8 = inlined_call_operand.hbm [shape: bf16[2,32,256], index: 8, kind: input, shape index: {}]
  %s9 = inlined_call_operand.vmem [shape: bf16[2,128,128], index: 9, kind: input, shape index: {}]
  %s10 = inlined_call_operand.vmem [shape: bf16[2,128,16], index: 10, kind: input, shape index: {}]
  %s11 = inlined_call_operand.hbm [shape: bf16[2,16,128], index: 11, kind: input, shape index: {}]
  %s12 = inlined_call_operand.hbm [shape: f32[16,128], index: 12, kind: output, shape index: {}]
  %s13 = sld [smem:[#allocation0]]
  $region113: #{tpu_custom_call.1} parent=0
    _
  %s15 = ssub.s32 1, %s13
  %s16 = scalar_select 0, %s15, %s13
  %18 = dma.hbm_to_smem %s0, 16, [#allocation6], [#allocation5]
  %19 = dma.done [#allocation5], 16
  %20 = sfence
  $region1: #{tpu_custom_call.1} parent=0
    #allocation7 [shape = 'u8[8192]{0}', space=vmem, size = 0x2000, scoped, tag = 'input window, operand 1, single buffered']
    #allocation8 [shape = 's32[2]{0}', space=sflag, size = 0x8, scoped, tag = 'scoped memory for tpu_custom_call.1']
    #allocation9 [shape = 's32[2]{0}', space=sflag, size = 0x8, scoped, tag = 'scoped memory for tpu_custom_call.1']
    #allocation10 [shape = 'u8[16384]{0}', space=vmem, size = 0x4000, scoped, tag = 'input window, operand 4']
    #allocation11 [shape = 's32[2]{0}', space=sflag, size = 0x8, scoped, tag = 'scoped memory for tpu_custom_call.1']
    #allocation12 [shape = 'u8[1024]{0}', space=vmem, size = 0x400, scoped, tag = 'input window, operand 5']
    #allocation13 [shape = 'u8[32768]{0}', space=vmem, size = 0x8000, scoped, tag = 'input window, operand 8']
    #allocation14 [shape = 's32[2]{0}', space=sflag, size = 0x8, scoped, tag = 'scoped memory for tpu_custom_call.1']
    #allocation15 [shape = 'u8[8192]{0}', space=vmem, size = 0x2000, scoped, tag = 'input window, operand 11']
    #allocation16 [shape = 'u8[8192]{0}', space=vmem, size = 0x2000, scoped, tag = 'output window, operand 0, single buffered']
    %21 = vsyncpa [#allocation8], 0
    %22 = vsyncpa [#allocation11], 0
    %s23 = scalar_lea.sflag [#allocation11], 1
    %24 = vsyncpa %s23, 0
    %25 = vsyncpa [#allocation14], 0
    %s26 = scalar_lea.sflag [#allocation14], 1
    %27 = vsyncpa %s26, 0
    %28 = vsyncpa [#allocation9], 0
    loop: start=0, step=1, limit=4
    $region2: #{tpu_custom_call.1} parent=1 // loop_pre_header
      _
    $region3: #{tpu_custom_call.1} parent=1 // loop_header
      %s30 = sphi 0, %s34
      %p31 = scmp.ge.s32.totalorder %s30, 4
      %s37 = sphi 0, %s56
      %s38 = sphi 0, %s52
      %s39 = sphi 0, %s48
      %s40 = sphi 0, %s37
      %s41 = sphi 0, %s38
      %s42 = sphi 0, %s39
      %s43 = sphi 0, %s40
      %s44 = sphi 0, %s41
      %s45 = sphi 0, %s42
      %s59 = sphi 0, %s61
      %s62 = sphi 0, %s59
      %s63 = sphi 0, %s62
      %s79 = sphi 0, %s63
      %s87 = sphi 0, %s89
      %s90 = sphi 0, %s87
      %s91 = sphi 0, %s90
      %s107 = sphi 0, %s91
      %s115 = sphi 0, %s117
      %s118 = sphi 0, %s115
      %s119 = sphi 0, %s118
      %s135 = sphi 0, %s119
      %s143 = sphi 0, %s145
      %s146 = sphi 0, %s143
      %s147 = sphi 0, %s146
      %s163 = sphi 0, %s147
      %s169 = sphi 0, %s171
      %s172 = sphi 0, %s169
      %s173 = sphi 0, %s172
      %s189 = sphi 0, %s173
      %s197 = sphi 0, %s199
      %s200 = sphi 0, %s197
      %s201 = sphi 0, %s200
      %s217 = sphi 0, %s201
      %s223 = sphi 0, %s225
      %s226 = sphi 0, %s223
      %s227 = sphi 0, %s226
      %s243 = sphi 0, %s227
      %s251 = sphi 0, %s253
      %s254 = sphi 0, %s251
      %s255 = sphi 0, %s254
      %s271 = sphi 0, %s255
      %s279 = sphi 0, %s281
      %s282 = sphi 0, %s279
      %s283 = sphi 0, %s282
      %s299 = sphi 0, %s283
      %s307 = sphi 0, %s309
      %s310 = sphi 0, %s307
      %s311 = sphi 0, %s310
      %s327 = sphi 0, %s311
      %s333 = sphi 0, %s335
      %s336 = sphi 0, %s333
      %s337 = sphi 0, %s336
      %s353 = sphi 0, %s337
      %s359 = sphi 0, %s361
      %s362 = sphi 0, %s359
      %s363 = sphi 0, %s362
      %s379 = sphi 0, %s363
    $region4: #{tpu_custom_call.1} parent=1 // loop_header_branch
      %33 = sbr.rel (%p31) target = $region8
    $region5: #{tpu_custom_call.1} parent=1 // loop_body
      %s35 = ssub.s32 %s30, 1
      %s36 = ssub.s32 %s30, 2
      %s46 = sadd.s32 1, %s39
      %p47 = scmp.ge.s32.totalorder %s46, 1
      %s48 = scalar_select %p47, 0, %s46
      %s49 = sadd.s32 1, %s38
      %s50 = scalar_select %p47, %s49, %s38
      %p51 = scmp.ge.s32.totalorder %s50, 2
      %s52 = scalar_select %p51, 0, %s50
      %s53 = sadd.s32 1, %s37
      %s54 = scalar_select %p51, %s53, %s37
      %p55 = scmp.ge.s32.totalorder %s54, 1
      %s56 = scalar_select %p55, 0, %s54
      %s57 = ssub.s32 %s37, %s56
      %p58 = scmp.eq.s32.totalorder %s57, 0
      %s60 = sadd.s32 %s59, 1
      %s61 = scalar_select %p58, %s59, %s60
      %p64 = pneg %p58
      %p65 = scmp.eq.s32.totalorder %s30, 1
      %p66 = por %p64, %p65
      %p67 = scmp.ne.s32.totalorder %s59, %s62
      %p68 = scmp.eq.s32.totalorder %s30, 0
      %p69 = por %p67, %p68
      %p70 = scmp.ne.s32.totalorder %s59, %s62
      %p71 = scmp.eq.s32.totalorder %s35, 1
      %p72 = por %p70, %p71
      %p73 = scmp.ne.s32.totalorder %s62, %s63
      %p74 = scmp.eq.s32.totalorder %s35, 0
      %p75 = por %p73, %p74
      %p76 = scmp.ne.s32.totalorder %s62, %s63
      %p77 = scmp.eq.s32.totalorder %s36, 1
      %p78 = por %p76, %p77
      %p80 = scmp.ne.s32.totalorder %s63, %s79
      %p81 = scmp.eq.s32.totalorder %s36, 0
      %p82 = por %p80, %p81
      %s83 = ssub.s32 %s38, %s52
      %s84 = ssub.s32 %s37, %s56
      %s85 = sor.u32 %s83, %s84
      %p86 = scmp.eq.s32.totalorder %s85, 0
      %s88 = sadd.s32 %s87, 1
      %s89 = scalar_select %p86, %s87, %s88
      %p92 = pneg %p86
      %p93 = scmp.eq.s32.totalorder %s30, 1
      %p94 = por %p92, %p93
      %p95 = scmp.ne.s32.totalorder %s87, %s90
      %p96 = scmp.eq.s32.totalorder %s30, 0
      %p97 = por %p95, %p96
      %p98 = scmp.ne.s32.totalorder %s87, %s90
      %p99 = scmp.eq.s32.totalorder %s35, 1
      %p100 = por %p98, %p99
      %p101 = scmp.ne.s32.totalorder %s90, %s91
      %p102 = scmp.eq.s32.totalorder %s35, 0
      %p103 = por %p101, %p102
      %p104 = scmp.ne.s32.totalorder %s90, %s91
      %p105 = scmp.eq.s32.totalorder %s36, 1
      %p106 = por %p104, %p105
      %p108 = scmp.ne.s32.totalorder %s91, %s107
      %p109 = scmp.eq.s32.totalorder %s36, 0
      %p110 = por %p108, %p109
      %s111 = ssub.s32 %s38, %s52
      %s112 = ssub.s32 %s37, %s56
      %s113 = sor.u32 %s111, %s112
      %p114 = scmp.eq.s32.totalorder %s113, 0
      %s116 = sadd.s32 %s115, 1
      %s117 = scalar_select %p114, %s115, %s116
      %p120 = pneg %p114
      %p121 = scmp.eq.s32.totalorder %s30, 1
      %p122 = por %p120, %p121
      %p123 = scmp.ne.s32.totalorder %s115, %s118
      %p124 = scmp.eq.s32.totalorder %s30, 0
      %p125 = por %p123, %p124
      %p126 = scmp.ne.s32.totalorder %s115, %s118
      %p127 = scmp.eq.s32.totalorder %s35, 1
      %p128 = por %p126, %p127
      %p129 = scmp.ne.s32.totalorder %s118, %s119
      %p130 = scmp.eq.s32.totalorder %s35, 0
      %p131 = por %p129, %p130
      %p132 = scmp.ne.s32.totalorder %s118, %s119
      %p133 = scmp.eq.s32.totalorder %s36, 1
      %p134 = por %p132, %p133
      %p136 = scmp.ne.s32.totalorder %s119, %s135
      %p137 = scmp.eq.s32.totalorder %s36, 0
      %p138 = por %p136, %p137
      %s139 = ssub.s32 %s38, %s52
      %s140 = ssub.s32 %s37, %s56
      %s141 = sor.u32 %s139, %s140
      %p142 = scmp.eq.s32.totalorder %s141, 0
      %s144 = sadd.s32 %s143, 1
      %s145 = scalar_select %p142, %s143, %s144
      %p148 = pneg %p142
      %p149 = scmp.eq.s32.totalorder %s30, 1
      %p150 = por %p148, %p149
      %p151 = scmp.ne.s32.totalorder %s143, %s146
      %p152 = scmp.eq.s32.totalorder %s30, 0
      %p153 = por %p151, %p152
      %p154 = scmp.ne.s32.totalorder %s143, %s146
      %p155 = scmp.eq.s32.totalorder %s35, 1
      %p156 = por %p154, %p155
      %p157 = scmp.ne.s32.totalorder %s146, %s147
      %p158 = scmp.eq.s32.totalorder %s35, 0
      %p159 = por %p157, %p158
      %p160 = scmp.ne.s32.totalorder %s146, %s147
      %p161 = scmp.eq.s32.totalorder %s36, 1
      %p162 = por %p160, %p161
      %p164 = scmp.ne.s32.totalorder %s147, %s163
      %p165 = scmp.eq.s32.totalorder %s36, 0
      %p166 = por %p164, %p165
      %s167 = ssub.s32 %s38, %s52
      %p168 = scmp.eq.s32.totalorder %s167, 0
      %s170 = sadd.s32 %s169, 1
      %s171 = scalar_select %p168, %s169, %s170
      %p174 = pneg %p168
      %p175 = scmp.eq.s32.totalorder %s30, 1
      %p176 = por %p174, %p175
      %p177 = scmp.ne.s32.totalorder %s169, %s172
      %p178 = scmp.eq.s32.totalorder %s30, 0
      %p179 = por %p177, %p178
      %p180 = scmp.ne.s32.totalorder %s169, %s172
      %p181 = scmp.eq.s32.totalorder %s35, 1
      %p182 = por %p180, %p181
      %p183 = scmp.ne.s32.totalorder %s172, %s173
      %p184 = scmp.eq.s32.totalorder %s35, 0
      %p185 = por %p183, %p184
      %p186 = scmp.ne.s32.totalorder %s172, %s173
      %p187 = scmp.eq.s32.totalorder %s36, 1
      %p188 = por %p186, %p187
      %p190 = scmp.ne.s32.totalorder %s173, %s189
      %p191 = scmp.eq.s32.totalorder %s36, 0
      %p192 = por %p190, %p191
      %s193 = ssub.s32 %s38, %s52
      %s194 = ssub.s32 %s39, %s48
      %s195 = sor.u32 %s193, %s194
      %p196 = scmp.eq.s32.totalorder %s195, 0
      %s198 = sadd.s32 %s197, 1
      %s199 = scalar_select %p196, %s197, %s198
      %p202 = pneg %p196
      %p203 = scmp.eq.s32.totalorder %s30, 1
      %p204 = por %p202, %p203
      %p205 = scmp.ne.s32.totalorder %s197, %s200
      %p206 = scmp.eq.s32.totalorder %s30, 0
      %p207 = por %p205, %p206
      %p208 = scmp.ne.s32.totalorder %s197, %s200
      %p209 = scmp.eq.s32.totalorder %s35, 1
      %p210 = por %p208, %p209
      %p211 = scmp.ne.s32.totalorder %s200, %s201
      %p212 = scmp.eq.s32.totalorder %s35, 0
      %p213 = por %p211, %p212
      %p214 = scmp.ne.s32.totalorder %s200, %s201
      %p215 = scmp.eq.s32.totalorder %s36, 1
      %p216 = por %p214, %p215
      %p218 = scmp.ne.s32.totalorder %s201, %s217
      %p219 = scmp.eq.s32.totalorder %s36, 0
      %p220 = por %p218, %p219
      %s221 = ssub.s32 %s38, %s52
      %p222 = scmp.eq.s32.totalorder %s221, 0
      %s224 = sadd.s32 %s223, 1
      %s225 = scalar_select %p222, %s223, %s224
      %p228 = pneg %p222
      %p229 = scmp.eq.s32.totalorder %s30, 1
      %p230 = por %p228, %p229
      %p231 = scmp.ne.s32.totalorder %s223, %s226
      %p232 = scmp.eq.s32.totalorder %s30, 0
      %p233 = por %p231, %p232
      %p234 = scmp.ne.s32.totalorder %s223, %s226
      %p235 = scmp.eq.s32.totalorder %s35, 1
      %p236 = por %p234, %p235
      %p237 = scmp.ne.s32.totalorder %s226, %s227
      %p238 = scmp.eq.s32.totalorder %s35, 0
      %p239 = por %p237, %p238
      %p240 = scmp.ne.s32.totalorder %s226, %s227
      %p241 = scmp.eq.s32.totalorder %s36, 1
      %p242 = por %p240, %p241
      %p244 = scmp.ne.s32.totalorder %s227, %s243
      %p245 = scmp.eq.s32.totalorder %s36, 0
      %p246 = por %p244, %p245
      %s247 = ssub.s32 %s38, %s52
      %s248 = ssub.s32 %s39, %s48
      %s249 = sor.u32 %s247, %s248
      %p250 = scmp.eq.s32.totalorder %s249, 0
      %s252 = sadd.s32 %s251, 1
      %s253 = scalar_select %p250, %s251, %s252
      %p256 = pneg %p250
      %p257 = scmp.eq.s32.totalorder %s30, 1
      %p258 = por %p256, %p257
      %p259 = scmp.ne.s32.totalorder %s251, %s254
      %p260 = scmp.eq.s32.totalorder %s30, 0
      %p261 = por %p259, %p260
      %p262 = scmp.ne.s32.totalorder %s251, %s254
      %p263 = scmp.eq.s32.totalorder %s35, 1
      %p264 = por %p262, %p263
      %p265 = scmp.ne.s32.totalorder %s254, %s255
      %p266 = scmp.eq.s32.totalorder %s35, 0
      %p267 = por %p265, %p266
      %p268 = scmp.ne.s32.totalorder %s254, %s255
      %p269 = scmp.eq.s32.totalorder %s36, 1
      %p270 = por %p268, %p269
      %p272 = scmp.ne.s32.totalorder %s255, %s271
      %p273 = scmp.eq.s32.totalorder %s36, 0
      %p274 = por %p272, %p273
      %s275 = ssub.s32 %s38, %s52
      %s276 = ssub.s32 %s39, %s48
      %s277 = sor.u32 %s275, %s276
      %p278 = scmp.eq.s32.totalorder %s277, 0
      %s280 = sadd.s32 %s279, 1
      %s281 = scalar_select %p278, %s279, %s280
      %p284 = pneg %p278
      %p285 = scmp.eq.s32.totalorder %s30, 1
      %p286 = por %p284, %p285
      %p287 = scmp.ne.s32.totalorder %s279, %s282
      %p288 = scmp.eq.s32.totalorder %s30, 0
      %p289 = por %p287, %p288
      %p290 = scmp.ne.s32.totalorder %s279, %s282
      %p291 = scmp.eq.s32.totalorder %s35, 1
      %p292 = por %p290, %p291
      %p293 = scmp.ne.s32.totalorder %s282, %s283
      %p294 = scmp.eq.s32.totalorder %s35, 0
      %p295 = por %p293, %p294
      %p296 = scmp.ne.s32.totalorder %s282, %s283
      %p297 = scmp.eq.s32.totalorder %s36, 1
      %p298 = por %p296, %p297
      %p300 = scmp.ne.s32.totalorder %s283, %s299
      %p301 = scmp.eq.s32.totalorder %s36, 0
      %p302 = por %p300, %p301
      %s303 = ssub.s32 %s38, %s52
      %s304 = ssub.s32 %s39, %s48
      %s305 = sor.u32 %s303, %s304
      %p306 = scmp.eq.s32.totalorder %s305, 0
      %s308 = sadd.s32 %s307, 1
      %s309 = scalar_select %p306, %s307, %s308
      %p312 = pneg %p306
      %p313 = scmp.eq.s32.totalorder %s30, 1
      %p314 = por %p312, %p313
      %p315 = scmp.ne.s32.totalorder %s307, %s310
      %p316 = scmp.eq.s32.totalorder %s30, 0
      %p317 = por %p315, %p316
      %p318 = scmp.ne.s32.totalorder %s307, %s310
      %p319 = scmp.eq.s32.totalorder %s35, 1
      %p320 = por %p318, %p319
      %p321 = scmp.ne.s32.totalorder %s310, %s311
      %p322 = scmp.eq.s32.totalorder %s35, 0
      %p323 = por %p321, %p322
      %p324 = scmp.ne.s32.totalorder %s310, %s311
      %p325 = scmp.eq.s32.totalorder %s36, 1
      %p326 = por %p324, %p325
      %p328 = scmp.ne.s32.totalorder %s311, %s327
      %p329 = scmp.eq.s32.totalorder %s36, 0
      %p330 = por %p328, %p329
      %s331 = ssub.s32 %s38, %s52
      %p332 = scmp.eq.s32.totalorder %s331, 0
      %s334 = sadd.s32 %s333, 1
      %s335 = scalar_select %p332, %s333, %s334
      %p338 = pneg %p332
      %p339 = scmp.eq.s32.totalorder %s30, 1
      %p340 = por %p338, %p339
      %p341 = scmp.ne.s32.totalorder %s333, %s336
      %p342 = scmp.eq.s32.totalorder %s30, 0
      %p343 = por %p341, %p342
      %p344 = scmp.ne.s32.totalorder %s333, %s336
      %p345 = scmp.eq.s32.totalorder %s35, 1
      %p346 = por %p344, %p345
      %p347 = scmp.ne.s32.totalorder %s336, %s337
      %p348 = scmp.eq.s32.totalorder %s35, 0
      %p349 = por %p347, %p348
      %p350 = scmp.ne.s32.totalorder %s336, %s337
      %p351 = scmp.eq.s32.totalorder %s36, 1
      %p352 = por %p350, %p351
      %p354 = scmp.ne.s32.totalorder %s337, %s353
      %p355 = scmp.eq.s32.totalorder %s36, 0
      %p356 = por %p354, %p355
      %s357 = ssub.s32 %s37, %s56
      %p358 = scmp.eq.s32.totalorder %s357, 0
      %s360 = sadd.s32 %s359, 1
      %s361 = scalar_select %p358, %s359, %s360
      %p364 = pneg %p358
      %p365 = scmp.eq.s32.totalorder %s30, 1
      %p366 = por %p364, %p365
      %p367 = scmp.ne.s32.totalorder %s359, %s362
      %p368 = scmp.eq.s32.totalorder %s30, 0
      %p369 = por %p367, %p368
      %p370 = scmp.ne.s32.totalorder %s359, %s362
      %p371 = scmp.eq.s32.totalorder %s35, 1
      %p372 = por %p370, %p371
      %p373 = scmp.ne.s32.totalorder %s362, %s363
      %p374 = scmp.eq.s32.totalorder %s35, 0
      %p375 = por %p373, %p374
      %p376 = scmp.ne.s32.totalorder %s362, %s363
      %p377 = scmp.eq.s32.totalorder %s36, 1
      %p378 = por %p376, %p377
      %p380 = scmp.ne.s32.totalorder %s363, %s379
      %p381 = scmp.eq.s32.totalorder %s36, 0
      %p382 = por %p380, %p381
      %p383 = scmp.le.s32.totalorder 1, %s30
      %p384 = scmp.lt.s32.totalorder %s30, 3
      %p385 = pnand %p383, %p384
      %p386 = pneg %p385
      // Predicated region
      $region9: #{tpu_custom_call.1} parent=5 // pred_check
        _
      $region10: #{tpu_custom_call.1} parent=5 // pred_check_branch
        %388 = sbr.rel (%p385) target = $region12
      $region11: #{tpu_custom_call.1} parent=5 // pred_region
        %s389 = ssub.s32 %s30, 1
        // Predicated region
        $region13: #{tpu_custom_call.1} parent=11 // pred_check
          %p390 = pneg %p75
        $region14: #{tpu_custom_call.1} parent=11 // pred_check_branch
          %392 = sbr.rel (%p390) target = $region16
        $region15: #{tpu_custom_call.1} parent=11 // pred_region
          %s393 = smul.u32 2, %s40
          %s395 = ssub.s32 256, 256
          %396 = vsyncadd [#allocation8], %s395
          %s397 = smul.addr %s393, 128
          %s398 = scalar_lea.hbm %s1, %s397
          %s399 = sshll.u32 [#allocation7], 4
          %s400 = int_to_ptr.vmem [resolvable:$true] %s399
          %405 = dma.hbm_to_vmem [thread:$0]  %s398, 256, %s400, [#allocation8], 128, 128, 8
        $region16: #{tpu_custom_call.1} parent=11 // pred_fallthru
          _
      $region12: #{tpu_custom_call.1} parent=5 // pred_fallthru
        _
      %p406 = scmp.lt.s32.totalorder %s30, 2
      // Predicated region
      $region17: #{tpu_custom_call.1} parent=5 // pred_check
        %p407 = pneg %p406
      $region18: #{tpu_custom_call.1} parent=5 // pred_check_branch
        %409 = sbr.rel (%p407) target = $region20
      $region19: #{tpu_custom_call.1} parent=5 // pred_region
        // Predicated region
        $region21: #{tpu_custom_call.1} parent=19 // pred_check
          %p410 = pneg %p97
        $region22: #{tpu_custom_call.1} parent=19 // pred_check_branch
          %412 = sbr.rel (%p410) target = $region24
        $region23: #{tpu_custom_call.1} parent=19 // pred_region
          %s413 = smul.u32 2, %s37
          %p414 = scmp.lt.s32.totalorder %s38, 1
          %s415 = scalar_select %p414, %s38, 1
          %p416 = scmp.lt.s32.totalorder %s413, 1
          %s417 = scalar_select %p416, %s413, 1
          %s418 = smul.addr %s415, 2
          %s419 = sadd.s32 %s417, %s418
          %s420 = smul.addr %s419, 8
          %s421 = scalar_lea.vmem %s2, %s420
          %s422 = smul.u32 2, %s37
        $region24: #{tpu_custom_call.1} parent=19 // pred_fallthru
          _
        // Predicated region
        $region25: #{tpu_custom_call.1} parent=19 // pred_check
          %p423 = pneg %p125
        $region26: #{tpu_custom_call.1} parent=19 // pred_check_branch
          %425 = sbr.rel (%p423) target = $region28
        $region27: #{tpu_custom_call.1} parent=19 // pred_region
          %s426 = smul.u32 2, %s37
          %p427 = scmp.lt.s32.totalorder %s38, 1
          %s428 = scalar_select %p427, %s38, 1
          %p429 = scmp.lt.s32.totalorder %s426, 1
          %s430 = scalar_select %p429, %s426, 1
          %s431 = smul.addr %s428, 2
          %s432 = sadd.s32 %s430, %s431
          %s433 = smul.addr %s432, 8
          %s434 = scalar_lea.vmem %s3, %s433
          %s435 = smul.u32 2, %s37
        $region28: #{tpu_custom_call.1} parent=19 // pred_fallthru
          _
        // Predicated region
        $region29: #{tpu_custom_call.1} parent=19 // pred_check
          %p436 = pneg %p153
        $region30: #{tpu_custom_call.1} parent=19 // pred_check_branch
          %438 = sbr.rel (%p436) target = $region32
        $region31: #{tpu_custom_call.1} parent=19 // pred_region
          %s439 = sand.u32 %s30, 1
          %s440 = scalar_lea.sflag [#allocation11], %s439
          %s441 = sand.u32 %s143, 1
          %s442 = smul.addr %s441, 16
          %s443 = scalar_lea.vmem [#allocation10], %s442
          %s444 = smul.u32 2, %s37
          %s446 = ssub.s32 256, 256
          %447 = vsyncadd %s440, %s446
          %s448 = smul.addr %s38, 2
          %s449 = sadd.s32 %s444, %s448
          %s450 = smul.addr %s449, 128
          %s451 = scalar_lea.hbm %s4, %s450
          %s452 = sshll.u32 %s443, 4
          %s453 = int_to_ptr.vmem [resolvable:$true] %s452
          %458 = dma.hbm_to_vmem [thread:$0]  %s451, 256, %s453, %s440, 128, 128, 8
        $region32: #{tpu_custom_call.1} parent=19 // pred_fallthru
          _
        // Predicated region
        $region33: #{tpu_custom_call.1} parent=19 // pred_check
          %p459 = pneg %p179
        $region34: #{tpu_custom_call.1} parent=19 // pred_check_branch
          %461 = sbr.rel (%p459) target = $region36
        $region35: #{tpu_custom_call.1} parent=19 // pred_region
          %s462 = sand.u32 %s30, 1
          %s463 = scalar_lea.sflag [#allocation11], %s462
          %s464 = sand.u32 %s169, 1
          %s465 = scalar_lea.vmem [#allocation12], %s464
          %s467 = ssub.s32 16, 16
          %468 = vsyncadd %s463, %s467
          %s469 = smul.addr %s38, 16
          %s470 = scalar_lea.hbm %s5, %s469
          %s472 = sshll.u32 %s465, 4
          %s473 = int_to_ptr.vmem [resolvable:$true] %s472
          %475 = dma.hbm_to_vmem [thread:$0]  %s470, 16, %s473, %s463
        $region36: #{tpu_custom_call.1} parent=19 // pred_fallthru
          _
        // Predicated region
        $region37: #{tpu_custom_call.1} parent=19 // pred_check
          %p476 = pneg %p207
        $region38: #{tpu_custom_call.1} parent=19 // pred_check_branch
          %478 = sbr.rel (%p476) target = $region40
        $region39: #{tpu_custom_call.1} parent=19 // pred_region
          %s479 = smul.u32 2, %s39
          %p480 = scmp.lt.s32.totalorder %s38, 1
          %s481 = scalar_select %p480, %s38, 1
          %p482 = scmp.lt.s32.totalorder %s479, 1
          %s483 = scalar_select %p482, %s479, 1
          %s484 = smul.addr %s481, 32
          %s485 = sadd.s32 %s483, %s484
          %s486 = smul.addr %s485, 4
          %s487 = scalar_lea.vmem %s6, %s486
          %s488 = smul.u32 2, %s39
        $region40: #{tpu_custom_call.1} parent=19 // pred_fallthru
          _
        // Predicated region
        $region41: #{tpu_custom_call.1} parent=19 // pred_check
          %p489 = pneg %p233
        $region42: #{tpu_custom_call.1} parent=19 // pred_check_branch
          %491 = sbr.rel (%p489) target = $region44
        $region43: #{tpu_custom_call.1} parent=19 // pred_region
          %p492 = scmp.lt.s32.totalorder %s38, 1
          %s493 = scalar_select %p492, %s38, 1
          %s494 = smul.addr %s493, 16
          %s495 = smul.addr %s494, 4
          %s496 = scalar_lea.vmem %s7, %s495
        $region44: #{tpu_custom_call.1} parent=19 // pred_fallthru
          _
        // Predicated region
        $region45: #{tpu_custom_call.1} parent=19 // pred_check
          %p497 = pneg %p261
        $region46: #{tpu_custom_call.1} parent=19 // pred_check_branch
          %499 = sbr.rel (%p497) target = $region48
        $region47: #{tpu_custom_call.1} parent=19 // pred_region
          %s500 = sand.u32 %s30, 1
          %s501 = scalar_lea.sflag [#allocation14], %s500
          %s502 = sand.u32 %s251, 1
          %s503 = smul.addr %s502, 32
          %s504 = scalar_lea.vmem [#allocation13], %s503
          %s505 = smul.u32 2, %s39
          %s507 = ssub.s32 512, 512
          %508 = vsyncadd %s501, %s507
          %s509 = smul.addr %s38, 8
          %s510 = sadd.s32 %s505, %s509
          %s511 = smul.addr %s510, 64
          %s512 = scalar_lea.hbm %s8, %s511
          %s513 = sshll.u32 %s504, 4
          %s514 = int_to_ptr.vmem [resolvable:$true] %s513
          %519 = dma.hbm_to_vmem [thread:$0]  %s512, 512, %s514, %s501, 128, 128, 8
        $region48: #{tpu_custom_call.1} parent=19 // pred_fallthru
          _
        // Predicated region
        $region49: #{tpu_custom_call.1} parent=19 // pred_check
          %p520 = pneg %p289
        $region50: #{tpu_custom_call.1} parent=19 // pred_check_branch
          %522 = sbr.rel (%p520) target = $region52
        $region51: #{tpu_custom_call.1} parent=19 // pred_region
          %s523 = smul.u32 16, %s39
          %p524 = scmp.lt.s32.totalorder %s38, 1
          %s525 = scalar_select %p524, %s38, 1
          %p526 = scmp.lt.s32.totalorder %s523, 15
          %s527 = scalar_select %p526, %s523, 15
          %s528 = smul.addr %s525, 16
          %s529 = sadd.s32 %s527, %s528
          %s530 = smul.addr %s529, 4
          %s531 = scalar_lea.vmem %s9, %s530
          %s532 = smul.u32 16, %s39
        $region52: #{tpu_custom_call.1} parent=19 // pred_fallthru
          _
        // Predicated region
        $region53: #{tpu_custom_call.1} parent=19 // pred_check
          %p533 = pneg %p317
        $region54: #{tpu_custom_call.1} parent=19 // pred_check_branch
          %535 = sbr.rel (%p533) target = $region56
        $region55: #{tpu_custom_call.1} parent=19 // pred_region
          %s536 = smul.u32 16, %s39
          %p537 = scmp.lt.s32.totalorder %s38, 1
          %s538 = scalar_select %p537, %s38, 1
          %p539 = scmp.lt.s32.totalorder %s536, 15
          %s540 = scalar_select %p539, %s536, 15
          %s541 = smul.addr %s538, 16
          %s542 = sadd.s32 %s540, %s541
          %s543 = smul.addr %s542, 4
          %s544 = scalar_lea.vmem %s10, %s543
          %s545 = smul.u32 16, %s39
        $region56: #{tpu_custom_call.1} parent=19 // pred_fallthru
          _
        // Predicated region
        $region57: #{tpu_custom_call.1} parent=19 // pred_check
          %p546 = pneg %p343
        $region58: #{tpu_custom_call.1} parent=19 // pred_check_branch
          %548 = sbr.rel (%p546) target = $region60
        $region59: #{tpu_custom_call.1} parent=19 // pred_region
          %s549 = sand.u32 %s30, 1
          %s550 = scalar_lea.sflag [#allocation14], %s549
          %s551 = sand.u32 %s333, 1
          %s552 = smul.addr %s551, 8
          %s553 = scalar_lea.vmem [#allocation15], %s552
          %s555 = ssub.s32 128, 128
          %556 = vsyncadd %s550, %s555
          %s557 = smul.addr %s38, 2
          %s558 = smul.addr %s557, 64
          %s559 = scalar_lea.hbm %s11, %s558
          %s560 = sshll.u32 %s553, 4
          %s561 = int_to_ptr.vmem [resolvable:$true] %s560
          %566 = dma.hbm_to_vmem [thread:$0]  %s559, 128, %s561, %s550, 64, 64, 4
        $region60: #{tpu_custom_call.1} parent=19 // pred_fallthru
          _
      $region20: #{tpu_custom_call.1} parent=5 // pred_fallthru
        _
      %p567 = scmp.le.s32.totalorder 1, %s30
      %p568 = scmp.lt.s32.totalorder %s30, 3
      %p569 = pnand %p567, %p568
      %p570 = pneg %p569
      // Predicated region
      $region61: #{tpu_custom_call.1} parent=5 // pred_check
        _
      $region62: #{tpu_custom_call.1} parent=5 // pred_check_branch
        %572 = sbr.rel (%p569) target = $region64
      $region63: #{tpu_custom_call.1} parent=5 // pred_region
        %s573 = ssub.s32 %s30, 1
        // Predicated region
        $region65: #{tpu_custom_call.1} parent=63 // pred_check
          %p574 = pneg %p75
        $region66: #{tpu_custom_call.1} parent=63 // pred_check_branch
          %576 = sbr.rel (%p574) target = $region68
        $region67: #{tpu_custom_call.1} parent=63 // pred_region
          %577 = dma.done [#allocation8], 256
        $region68: #{tpu_custom_call.1} parent=63 // pred_fallthru
          _
        %s578 = sand.u32 %s35, 1
        %s579 = scalar_lea.sflag [#allocation11], %s578
        %s580 = sand.u32 %s146, 1
        %s581 = smul.addr %s580, 16
        %s582 = scalar_lea.vmem [#allocation10], %s581
        // Predicated region
        $region69: #{tpu_custom_call.1} parent=63 // pred_check
          %p583 = pneg %p159
        $region70: #{tpu_custom_call.1} parent=63 // pred_check_branch
          %585 = sbr.rel (%p583) target = $region72
        $region71: #{tpu_custom_call.1} parent=63 // pred_region
          %586 = dma.done %s579, 256
        $region72: #{tpu_custom_call.1} parent=63 // pred_fallthru
          _
        %s587 = sand.u32 %s35, 1
        %s588 = scalar_lea.sflag [#allocation11], %s587
        %s589 = sand.u32 %s172, 1
        %s590 = scalar_lea.vmem [#allocation12], %s589
        // Predicated region
        $region73: #{tpu_custom_call.1} parent=63 // pred_check
          %p591 = pneg %p185
        $region74: #{tpu_custom_call.1} parent=63 // pred_check_branch
          %593 = sbr.rel (%p591) target = $region76
        $region75: #{tpu_custom_call.1} parent=63 // pred_region
          %594 = dma.done %s588, 16
        $region76: #{tpu_custom_call.1} parent=63 // pred_fallthru
          _
        %s595 = sand.u32 %s35, 1
        %s596 = scalar_lea.sflag [#allocation14], %s595
        %s597 = sand.u32 %s254, 1
        %s598 = smul.addr %s597, 32
        %s599 = scalar_lea.vmem [#allocation13], %s598
        // Predicated region
        $region77: #{tpu_custom_call.1} parent=63 // pred_check
          %p600 = pneg %p267
        $region78: #{tpu_custom_call.1} parent=63 // pred_check_branch
          %602 = sbr.rel (%p600) target = $region80
        $region79: #{tpu_custom_call.1} parent=63 // pred_region
          %603 = dma.done %s596, 512
        $region80: #{tpu_custom_call.1} parent=63 // pred_fallthru
          _
        %s604 = sand.u32 %s35, 1
        %s605 = scalar_lea.sflag [#allocation14], %s604
        %s606 = sand.u32 %s336, 1
        %s607 = smul.addr %s606, 8
        %s608 = scalar_lea.vmem [#allocation15], %s607
        // Predicated region
        $region81: #{tpu_custom_call.1} parent=63 // pred_check
          %p609 = pneg %p349
        $region82: #{tpu_custom_call.1} parent=63 // pred_check_branch
          %611 = sbr.rel (%p609) target = $region84
        $region83: #{tpu_custom_call.1} parent=63 // pred_region
          %612 = dma.done %s605, 128
        $region84: #{tpu_custom_call.1} parent=63 // pred_fallthru
          _
        %p613 = pneg %p75
        %p614 = pneg %p72
        %s615 = smul.u32 2, %s40
        %p616 = scmp.lt.s32.totalorder %s41, 1
        %s617 = scalar_select %p616, %s41, 1
        %p618 = scmp.lt.s32.totalorder %s615, 1
        %s619 = scalar_select %p618, %s615, 1
        %s620 = smul.addr %s617, 2
        %s621 = sadd.s32 %s619, %s620
        %s622 = smul.addr %s621, 8
        %s623 = scalar_lea.vmem %s2, %s622
        %p624 = pneg %p103
        %p625 = pneg %p100
        %s626 = smul.u32 2, %s40
        %p627 = scmp.lt.s32.totalorder %s41, 1
        %s628 = scalar_select %p627, %s41, 1
        %p629 = scmp.lt.s32.totalorder %s626, 1
        %s630 = scalar_select %p629, %s626, 1
        %s631 = smul.addr %s628, 2
        %s632 = sadd.s32 %s630, %s631
        %s633 = smul.addr %s632, 8
        %s634 = scalar_lea.vmem %s3, %s633
        %p635 = pneg %p131
        %p636 = pneg %p128
        %s637 = sand.u32 %s35, 1
        %s638 = scalar_lea.sflag [#allocation11], %s637
        %s639 = sand.u32 %s146, 1
        %s640 = smul.addr %s639, 16
        %s641 = scalar_lea.vmem [#allocation10], %s640
        %p642 = pneg %p159
        %p643 = pneg %p156
        %s644 = sand.u32 %s35, 1
        %s645 = scalar_lea.sflag [#allocation11], %s644
        %s646 = sand.u32 %s172, 1
        %s647 = scalar_lea.vmem [#allocation12], %s646
        %p648 = pneg %p185
        %p649 = pneg %p182
        %s650 = smul.u32 2, %s42
        %p651 = scmp.lt.s32.totalorder %s41, 1
        %s652 = scalar_select %p651, %s41, 1
        %p653 = scmp.lt.s32.totalorder %s650, 1
        %s654 = scalar_select %p653, %s650, 1
        %s655 = smul.addr %s652, 32
        %s656 = sadd.s32 %s654, %s655
        %s657 = smul.addr %s656, 4
        %s658 = scalar_lea.vmem %s6, %s657
        %p659 = pneg %p213
        %p660 = pneg %p210
        %p661 = scmp.lt.s32.totalorder %s41, 1
        %s662 = scalar_select %p661, %s41, 1
        %s663 = smul.addr %s662, 16
        %s664 = smul.addr %s663, 4
        %s665 = scalar_lea.vmem %s7, %s664
        %p666 = pneg %p239
        %p667 = pneg %p236
        %s668 = sand.u32 %s35, 1
        %s669 = scalar_lea.sflag [#allocation14], %s668
        %s670 = sand.u32 %s254, 1
        %s671 = smul.addr %s670, 32
        %s672 = scalar_lea.vmem [#allocation13], %s671
        %p673 = pneg %p267
        %p674 = pneg %p264
        %s675 = smul.u32 16, %s42
        %p676 = scmp.lt.s32.totalorder %s41, 1
        %s677 = scalar_select %p676, %s41, 1
        %p678 = scmp.lt.s32.totalorder %s675, 15
        %s679 = scalar_select %p678, %s675, 15
        %s680 = smul.addr %s677, 16
        %s681 = sadd.s32 %s679, %s680
        %s682 = smul.addr %s681, 4
        %s683 = scalar_lea.vmem %s9, %s682
        %p684 = pneg %p295
        %p685 = pneg %p292
        %s686 = smul.u32 16, %s42
        %p687 = scmp.lt.s32.totalorder %s41, 1
        %s688 = scalar_select %p687, %s41, 1
        %p689 = scmp.lt.s32.totalorder %s686, 15
        %s690 = scalar_select %p689, %s686, 15
        %s691 = smul.addr %s688, 16
        %s692 = sadd.s32 %s690, %s691
        %s693 = smul.addr %s692, 4
        %s694 = scalar_lea.vmem %s10, %s693
        %p695 = pneg %p323
        %p696 = pneg %p320
        %s697 = sand.u32 %s35, 1
        %s698 = scalar_lea.sflag [#allocation14], %s697
        %s699 = sand.u32 %s336, 1
        %s700 = smul.addr %s699, 8
        %s701 = scalar_lea.vmem [#allocation15], %s700
        %p702 = pneg %p349
        %p703 = pneg %p346
        %p704 = pneg %p375
        %p705 = pneg %p372
        %s706 = smul.u32 2, %s40
        %s707 = smul.u32 2, %s40
        %p708 = scmp.lt.s32.totalorder %s41, 1
        %s709 = scalar_select %p708, %s41, 1
        %p710 = scmp.lt.s32.totalorder %s707, 1
        %s711 = scalar_select %p710, %s707, 1
        %s712 = smul.addr %s709, 2
        %s713 = sadd.s32 %s711, %s712
        %s714 = smul.addr %s713, 8
        %s715 = scalar_lea.vmem %s2, %s714
        %s716 = smul.u32 2, %s40
        %s717 = smul.u32 2, %s40
        %p718 = scmp.lt.s32.totalorder %s41, 1
        %s719 = scalar_select %p718, %s41, 1
        %p720 = scmp.lt.s32.totalorder %s717, 1
        %s721 = scalar_select %p720, %s717, 1
        %s722 = smul.addr %s719, 2
        %s723 = sadd.s32 %s721, %s722
        %s724 = smul.addr %s723, 8
        %s725 = scalar_lea.vmem %s3, %s724
        %s726 = smul.u32 2, %s40
        %s727 = smul.u32 2, %s40
        %s728 = smul.u32 2, %s42
        %p729 = scmp.lt.s32.totalorder %s41, 1
        %s730 = scalar_select %p729, %s41, 1
        %p731 = scmp.lt.s32.totalorder %s728, 1
        %s732 = scalar_select %p731, %s728, 1
        %s733 = smul.addr %s730, 32
        %s734 = sadd.s32 %s732, %s733
        %s735 = smul.addr %s734, 4
        %s736 = scalar_lea.vmem %s6, %s735
        %s737 = smul.u32 2, %s42
        %p738 = scmp.lt.s32.totalorder %s41, 1
        %s739 = scalar_select %p738, %s41, 1
        %s740 = smul.addr %s739, 16
        %s741 = smul.addr %s740, 4
        %s742 = scalar_lea.vmem %s7, %s741
        %s743 = smul.u32 2, %s42
        %s744 = smul.u32 16, %s42
        %p745 = scmp.lt.s32.totalorder %s41, 1
        %s746 = scalar_select %p745, %s41, 1
        %p747 = scmp.lt.s32.totalorder %s744, 15
        %s748 = scalar_select %p747, %s744, 15
        %s749 = smul.addr %s746, 16
        %s750 = sadd.s32 %s748, %s749
        %s751 = smul.addr %s750, 4
        %s752 = scalar_lea.vmem %s9, %s751
        %s753 = smul.u32 16, %s42
        %s754 = smul.u32 16, %s42
        %p755 = scmp.lt.s32.totalorder %s41, 1
        %s756 = scalar_select %p755, %s41, 1
        %p757 = scmp.lt.s32.totalorder %s754, 15
        %s758 = scalar_select %p757, %s754, 15
        %s759 = smul.addr %s756, 16
        %s760 = sadd.s32 %s758, %s759
        %s761 = smul.addr %s760, 4
        %s762 = scalar_lea.vmem %s10, %s761
        %s763 = smul.u32 16, %s42
        %s764 = smul.u32 2, %s40
        %p766 = scmp.eq.s32.totalorder %s41, 0
        %p767 = scmp.eq.s32.totalorder %s42, 0
        %p768 = pnand %p766, %p767
        %p769 = pneg %p768
        // Predicated region
        $region85: #{tpu_custom_call.1} parent=63 // pred_check
          _
        $region86: #{tpu_custom_call.1} parent=63 // pred_check_branch
          %771 = sbr.rel (%p768) target = $region88
        $region87: #{tpu_custom_call.1} parent=63 // pred_region
          %772 = vst [vmem:[#allocation16] sm:$0xff] 0.0
          %773 = vst [vmem:[#allocation16 + $0x8] sm:$0xff] 0.0
        $region88: #{tpu_custom_call.1} parent=63 // pred_fallthru
          _
        %s774 = sld [smem:[#allocation6 + %s41]]
        %p775 = scmp.ne.s32.totalorder %s774, 0
        // Predicated region
        $region89: #{tpu_custom_call.1} parent=63 // pred_check
          %p776 = pneg %p775
        $region90: #{tpu_custom_call.1} parent=63 // pred_check_branch
          %778 = sbr.rel (%p776) target = $region92
        $region91: #{tpu_custom_call.1} parent=63 // pred_region
          %v779 = vld [vmem:[%s715] sm:$0xff]
          %v780 = vld [vmem:[%s715 + $0x8] sm:$0xff]
          // Predicated region
          $region93: #{tpu_custom_call.1} parent=91 // pred_check
            %p781 = pneg %p767
          $region94: #{tpu_custom_call.1} parent=91 // pred_check_branch
            %783 = sbr.rel (%p781) target = $region96
          $region95: #{tpu_custom_call.1} parent=91 // pred_region
            %v784 = vld [vmem:[#allocation7] sm:$0xff]
            %v785 = vld [vmem:[#allocation7 + $0x8] sm:$0xff]
            %v786 = vld [vmem:[%s725] sm:$0xff]
            %v787 = vld [vmem:[%s725 + $0x8] sm:$0xff]
            %v788 = vld [vmem:[%s590] sm:$0x1]
            %v789 = vunpack.c.l.bf16 %v788
            %791 = vset.pattern.permute.xlu0 0
            %792 = vperm.xlu0 %791, %v786
            %v793 = vpop.permute.xlu0 %792
            %796 = vset.pattern.permute.xlu0 0
            %797 = vperm.xlu0 %796, %v787
            %v798 = vpop.permute.xlu0 %797
            %v800 = vlaneseq
            %v801 = vshrl.u32 %v800, 7
            %v802 = vsub.s32 0, %v801
            %v803 = vrot.slane %v789, %v802
            %v804 = vmul.f32 %v793, %v803
            %v805 = vmul.f32 %v798, %v803
            %v806 = vadd.f32 %v784, %v804
            %v807 = vadd.f32 %v785, %v805
            %808 = vset.pattern.permute.xlu0 1
            %809 = vperm.xlu0 %808, %v786
            %v810 = vpop.permute.xlu0 %809
            %812 = vset.pattern.permute.xlu0 1
            %813 = vperm.xlu0 %812, %v787
            %v814 = vpop.permute.xlu0 %813
            %v816 = vlaneseq
            %v817 = vshrl.u32 %v816, 7
            %v818 = vsub.s32 1, %v817
            %v819 = vrot.slane %v789, %v818
            %v820 = vmul.f32 %v810, %v819
            %v821 = vmul.f32 %v814, %v819
            %v822 = vadd.f32 %v806, %v820
            %v823 = vadd.f32 %v807, %v821
            %v824 = vpack.c.bf16 %v823, %v822
            %v826 = vunpack.c.l.b16 %v824
            %v827 = vunpack.c.h.b16 %v824
            %v828 = vpack.c.b16 %v826, %v826
            %v829 = vpack.c.b16 %v827, %v827
            %832 = vst [vmem:[#allocation2] sm:$0xf] %v828
            %833 = vst [vmem:[#allocation2 + $0x4] sm:$0xf] %v829
            %v834 = vld [vmem:[%s742] sm:$0xf]
            %v835 = vld [vmem:[%s742 + $0x4] sm:$0xf]
            %v836 = vld [vmem:[%s742 + $0x8] sm:$0xf]
            %v837 = vld [vmem:[%s742 + $0xc] sm:$0xf]
            %v838 = vld [vmem:[%s742 + $0x10] sm:$0xf]
            %v839 = vld [vmem:[%s742 + $0x14] sm:$0xf]
            %v840 = vld [vmem:[%s742 + $0x18] sm:$0xf]
            %v841 = vld [vmem:[%s742 + $0x1c] sm:$0xf]
            %v842 = vld [vmem:[%s742 + $0x20] sm:$0xf]
            %v843 = vld [vmem:[%s742 + $0x24] sm:$0xf]
            %v844 = vld [vmem:[%s742 + $0x28] sm:$0xf]
            %v845 = vld [vmem:[%s742 + $0x2c] sm:$0xf]
            %v846 = vld [vmem:[%s742 + $0x30] sm:$0xf]
            %v847 = vld [vmem:[%s742 + $0x34] sm:$0xf]
            %v848 = vld [vmem:[%s742 + $0x38] sm:$0xf]
            %v849 = vld [vmem:[%s742 + $0x3c] sm:$0xf]
            %v866 = vunpack.c.l.b16 %v834
            %v867 = vunpack.c.l.b16 %v835
            %v868 = vunpack.c.l.b16 %v836
            %v869 = vunpack.c.l.b16 %v837
            %v870 = vunpack.c.l.b16 %v838
            %v871 = vunpack.c.l.b16 %v839
            %v872 = vunpack.c.l.b16 %v840
            %v873 = vunpack.c.l.b16 %v841
            %v874 = vunpack.c.l.b16 %v842
            %v875 = vunpack.c.l.b16 %v843
            %v876 = vunpack.c.l.b16 %v844
            %v877 = vunpack.c.l.b16 %v845
            %v878 = vunpack.c.l.b16 %v846
            %v879 = vunpack.c.l.b16 %v847
            %v880 = vunpack.c.l.b16 %v848
            %v881 = vunpack.c.l.b16 %v849
            %v882 = vpack.c.b16 %v867, %v866
            %v883 = vpack.c.b16 %v869, %v868
            %v884 = vpack.c.b16 %v871, %v870
            %v885 = vpack.c.b16 %v873, %v872
            %v886 = vpack.c.b16 %v875, %v874
            %v887 = vpack.c.b16 %v877, %v876
            %v888 = vpack.c.b16 %v879, %v878
            %v889 = vpack.c.b16 %v881, %v880
            %898 = vmatprep.subr.bf16.mxu0 0
            %899 = vmatpush1.bf16.msra.mxu0 %v889
            %900 = vmatprep.subr.bf16.mxu0 0
            %901 = vmatpush1.bf16.msra.mxu0 %v888
            %902 = vmatprep.subr.bf16.mxu0 0
            %903 = vmatpush1.bf16.msra.mxu0 %v887
            %904 = vmatprep.subr.bf16.mxu0 0
            %905 = vmatpush1.bf16.msra.mxu0 %v886
            %906 = vmatprep.subr.bf16.mxu0 0
            %907 = vmatpush1.bf16.msra.mxu0 %v885
            %908 = vmatprep.subr.bf16.mxu0 0
            %909 = vmatpush1.bf16.msra.mxu0 %v884
            %910 = vmatprep.subr.bf16.mxu0 0
            %911 = vmatpush1.bf16.msra.mxu0 %v883
            %912 = vmatprep.subr.bf16.mxu0 0
            %913 = vmatpush1.bf16.msra.mxu0 %v882
            %914 = vmatprep.subr.bf16.mxu0 0
            %915 = vmatpush2.bf16.msra.mxu0 0
            %916 = vmatprep.subr.bf16.mxu0 0
            %917 = vmatpush2.bf16.msra.mxu0 0
            %918 = vmatprep.subr.bf16.mxu0 0
            %919 = vmatpush2.bf16.msra.mxu0 0
            %920 = vmatprep.subr.bf16.mxu0 0
            %921 = vmatpush2.bf16.msra.mxu0 0
            %922 = vmatprep.subr.bf16.mxu0 0
            %923 = vmatpush2.bf16.msra.mxu0 0
            %924 = vmatprep.subr.bf16.mxu0 0
            %925 = vmatpush2.bf16.msra.mxu0 0
            %926 = vmatprep.subr.bf16.mxu0 0
            %927 = vmatpush2.bf16.msra.mxu0 0
            %928 = vmatprep.subr.bf16.mxu0 0
            %929 = vmatpush2.bf16.msra.mxu0 0
            %930 = vmatprep.mubr.bf16.mxu0 0
            %931 = vmatmul.mubr.bf16.gmra.mxu0 %v824
            %v932 = vpop.f32.mrf.mxu0
            %v933 = vadd.f32 0.0, %v932
            %v934 = vpop.f32.mrf.mxu0
            %v935 = vpop.f32.mrf.mxu0
            %v936 = vadd.f32 0.0, %v935
            %v937 = vpop.f32.mrf.mxu0
            %938 = vdwg.mxu0
            %v939 = vld [vmem:[%s582] sm:$0xff]
            %v940 = vld [vmem:[%s582 + $0x8] sm:$0xff]
            %v941 = vmul.f32 %v933, %v939
            %v942 = vmul.f32 %v936, %v940
            %v943 = vpack.c.bf16 %v942, %v941
            %v945 = vunpack.c.l.b16 %v943
            %v946 = vunpack.c.h.b16 %v943
            %v947 = vpack.c.b16 %v945, %v945
            %v948 = vpack.c.b16 %v946, %v946
            %vm951 = vcmask 257024
            %952 = vst.msk [vmem:[#allocation3] sm:$0xf] %vm951, %v947
            %953 = vst.msk [vmem:[#allocation3 + $0x4] sm:$0xf] %vm951, %v948
            %vm954 = vcmask 130048
            %955 = vst.msk [vmem:[#allocation4] sm:$0xff] %vm954, 0.0
            %956 = vst.msk [vmem:[#allocation4 + $0x8] sm:$0xff] %vm954, 0.0
          $region96: #{tpu_custom_call.1} parent=91 // pred_fallthru
            _
          %v957 = vld [vmem:[#allocation2] sm:$0xf]
          %v958 = vld [vmem:[#allocation2 + $0x4] sm:$0xf]
          %v959 = vld [vmem:[%s736] sm:$0xff]
          %v960 = vld [vmem:[%s736 + $0x8] sm:$0xff]
          %v961 = vld [vmem:[%s736 + $0x10] sm:$0xff]
          %v962 = vld [vmem:[%s736 + $0x18] sm:$0xff]
          %v963 = vld [vmem:[%s736 + $0x20] sm:$0xff]
          %v964 = vld [vmem:[%s736 + $0x28] sm:$0xff]
          %v965 = vld [vmem:[%s736 + $0x30] sm:$0xff]
          %v966 = vld [vmem:[%s736 + $0x38] sm:$0xff]
          %v967 = vld [vmem:[%s736 + $0x40] sm:$0xff]
          %v968 = vld [vmem:[%s736 + $0x48] sm:$0xff]
          %v969 = vld [vmem:[%s736 + $0x50] sm:$0xff]
          %v970 = vld [vmem:[%s736 + $0x58] sm:$0xff]
          %v971 = vld [vmem:[%s736 + $0x60] sm:$0xff]
          %v972 = vld [vmem:[%s736 + $0x68] sm:$0xff]
          %v973 = vld [vmem:[%s736 + $0x70] sm:$0xff]
          %v974 = vld [vmem:[%s736 + $0x78] sm:$0xff]
          %v975 = vld [vmem:[#allocation3] sm:$0xf]
          %v976 = vld [vmem:[#allocation3 + $0x4] sm:$0xf]
          %v977 = vld [vmem:[%s599] sm:$0xff]
          %v978 = vld [vmem:[%s599 + $0x8] sm:$0xff]
          %v979 = vld [vmem:[%s599 + $0x10] sm:$0xff]
          %v980 = vld [vmem:[%s599 + $0x18] sm:$0xff]
          %v983 = vunpack.c.l.b16 %v975
          %v984 = vunpack.c.l.b16 %v976
          %v985 = vpack.c.b16 %v984, %v983
          %v990 = vunpack.c.l.b16 %v977
          %v991 = vunpack.c.h.b16 %v977
          %v992 = vunpack.c.l.b16 %v978
          %v993 = vunpack.c.h.b16 %v978
          %v994 = vunpack.c.l.b16 %v979
          %v995 = vunpack.c.h.b16 %v979
          %v996 = vunpack.c.l.b16 %v980
          %v997 = vunpack.c.h.b16 %v980
          %v998 = vpack.c.b16 %v992, %v990
          %v999 = vpack.c.b16 %v993, %v991
          %v1000 = vpack.c.b16 %v996, %v994
          %v1001 = vpack.c.b16 %v997, %v995
          %vm1006 = vcmask 261120
          %v1008 = vsel %vm1006, %v985, 0
          %1010 = vmatprep.subr.bf16.mxu0 0
          %1011 = vmatpush1.bf16.msra.mxu0 0
          %1012 = vmatprep.subr.bf16.mxu0 0
          %1013 = vmatpush1.bf16.msra.mxu0 0
          %1014 = vmatprep.subr.bf16.mxu0 0
          %1015 = vmatpush1.bf16.msra.mxu0 0
          %1016 = vmatprep.subr.bf16.mxu0 0
          %1017 = vmatpush1.bf16.msra.mxu0 0
          %1018 = vmatprep.subr.bf16.mxu0 0
          %1019 = vmatpush1.bf16.msra.mxu0 0
          %1020 = vmatprep.subr.bf16.mxu0 0
          %1021 = vmatpush1.bf16.msra.mxu0 0
          %1022 = vmatprep.subr.bf16.mxu0 %v1001
          %1023 = vmatpush1.bf16.msra.mxu0 %v1000
          %1024 = vmatprep.subr.bf16.mxu0 %v999
          %1025 = vmatpush1.bf16.msra.mxu0 %v998
          %1026 = vmatprep.subr.bf16.mxu0 0
          %1027 = vmatpush2.bf16.msra.mxu0 0
          %1028 = vmatprep.subr.bf16.mxu0 0
          %1029 = vmatpush2.bf16.msra.mxu0 0
          %1030 = vmatprep.subr.bf16.mxu0 0
          %1031 = vmatpush2.bf16.msra.mxu0 0
          %1032 = vmatprep.subr.bf16.mxu0 0
          %1033 = vmatpush2.bf16.msra.mxu0 0
          %1034 = vmatprep.subr.bf16.mxu0 0
          %1035 = vmatpush2.bf16.msra.mxu0 0
          %1036 = vmatprep.subr.bf16.mxu0 0
          %1037 = vmatpush2.bf16.msra.mxu0 0
          %1038 = vmatprep.subr.bf16.mxu0 0
          %1039 = vmatpush2.bf16.msra.mxu0 0
          %1040 = vmatprep.subr.bf16.mxu0 0
          %1041 = vmatpush2.bf16.msra.mxu0 0
          %1042 = vmatprep.mubr.bf16.mxu0 0
          %1043 = vmatmul.mubr.bf16.gmra.mxu0 %v1008
          %v1044 = vpop.f32.mrf.mxu0
          %v1045 = vadd.f32 0.0, %v1044
          %v1046 = vpop.f32.mrf.mxu0
          %v1047 = vadd.f32 0.0, %v1046
          %v1048 = vpop.f32.mrf.mxu0
          %v1049 = vadd.f32 0.0, %v1048
          %v1050 = vpop.f32.mrf.mxu0
          %v1051 = vadd.f32 0.0, %v1050
          %1052 = vdwg.mxu0
          %v1055 = vunpack.c.l.b16 %v957
          %v1056 = vunpack.c.l.b16 %v958
          %v1057 = vpack.c.b16 %v1056, %v1055
          %v1075 = vunpack.c.l.b16 %v959
          %v1076 = vunpack.c.h.b16 %v959
          %v1077 = vunpack.c.l.b16 %v960
          %v1078 = vunpack.c.h.b16 %v960
          %v1079 = vunpack.c.l.b16 %v961
          %v1080 = vunpack.c.h.b16 %v961
          %v1081 = vunpack.c.l.b16 %v962
          %v1082 = vunpack.c.h.b16 %v962
          %v1083 = vunpack.c.l.b16 %v963
          %v1084 = vunpack.c.h.b16 %v963
          %v1085 = vunpack.c.l.b16 %v964
          %v1086 = vunpack.c.h.b16 %v964
          %v1087 = vunpack.c.l.b16 %v965
          %v1088 = vunpack.c.h.b16 %v965
          %v1089 = vunpack.c.l.b16 %v966
          %v1090 = vunpack.c.h.b16 %v966
          %v1091 = vunpack.c.l.b16 %v967
          %v1092 = vunpack.c.h.b16 %v967
          %v1093 = vunpack.c.l.b16 %v968
          %v1094 = vunpack.c.h.b16 %v968
          %v1095 = vunpack.c.l.b16 %v969
          %v1096 = vunpack.c.h.b16 %v969
          %v1097 = vunpack.c.l.b16 %v970
          %v1098 = vunpack.c.h.b16 %v970
          %v1099 = vunpack.c.l.b16 %v971
          %v1100 = vunpack.c.h.b16 %v971
          %v1101 = vunpack.c.l.b16 %v972
          %v1102 = vunpack.c.h.b16 %v972
          %v1103 = vunpack.c.l.b16 %v973
          %v1104 = vunpack.c.h.b16 %v973
          %v1105 = vunpack.c.l.b16 %v974
          %v1106 = vunpack.c.h.b16 %v974
          %v1107 = vpack.c.b16 %v1077, %v1075
          %v1108 = vpack.c.b16 %v1078, %v1076
          %v1109 = vpack.c.b16 %v1081, %v1079
          %v1110 = vpack.c.b16 %v1082, %v1080
          %v1111 = vpack.c.b16 %v1085, %v1083
          %v1112 = vpack.c.b16 %v1086, %v1084
          %v1113 = vpack.c.b16 %v1089, %v1087
          %v1114 = vpack.c.b16 %v1090, %v1088
          %v1115 = vpack.c.b16 %v1093, %v1091
          %v1116 = vpack.c.b16 %v1094, %v1092
          %v1117 = vpack.c.b16 %v1097, %v1095
          %v1118 = vpack.c.b16 %v1098, %v1096
          %v1119 = vpack.c.b16 %v1101, %v1099
          %v1120 = vpack.c.b16 %v1102, %v1100
          %v1121 = vpack.c.b16 %v1105, %v1103
          %v1122 = vpack.c.b16 %v1106, %v1104
          %1139 = vmatprep.subr.bf16.mxu0 %v1122
          %1140 = vmatpush1.bf16.msra.mxu0 %v1121
          %1141 = vmatprep.subr.bf16.mxu0 %v1120
          %1142 = vmatpush1.bf16.msra.mxu0 %v1119
          %1143 = vmatprep.subr.bf16.mxu0 %v1118
          %1144 = vmatpush1.bf16.msra.mxu0 %v1117
          %1145 = vmatprep.subr.bf16.mxu0 %v1116
          %1146 = vmatpush1.bf16.msra.mxu0 %v1115
          %1147 = vmatprep.subr.bf16.mxu0 %v1114
          %1148 = vmatpush1.bf16.msra.mxu0 %v1113
          %1149 = vmatprep.subr.bf16.mxu0 %v1112
          %1150 = vmatpush1.bf16.msra.mxu0 %v1111
          %1151 = vmatprep.subr.bf16.mxu0 %v1110
          %1152 = vmatpush1.bf16.msra.mxu0 %v1109
          %1153 = vmatprep.subr.bf16.mxu0 %v1108
          %1154 = vmatpush1.bf16.msra.mxu0 %v1107
          %1155 = vmatprep.subr.bf16.mxu0 0
          %1156 = vmatpush2.bf16.msra.mxu0 0
          %1157 = vmatprep.subr.bf16.mxu0 0
          %1158 = vmatpush2.bf16.msra.mxu0 0
          %1159 = vmatprep.subr.bf16.mxu0 0
          %1160 = vmatpush2.bf16.msra.mxu0 0
          %1161 = vmatprep.subr.bf16.mxu0 0
          %1162 = vmatpush2.bf16.msra.mxu0 0
          %1163 = vmatprep.subr.bf16.mxu0 0
          %1164 = vmatpush2.bf16.msra.mxu0 0
          %1165 = vmatprep.subr.bf16.mxu0 0
          %1166 = vmatpush2.bf16.msra.mxu0 0
          %1167 = vmatprep.subr.bf16.mxu0 0
          %1168 = vmatpush2.bf16.msra.mxu0 0
          %1169 = vmatprep.subr.bf16.mxu0 0
          %1170 = vmatpush2.bf16.msra.mxu0 0
          %1171 = vmatprep.mubr.bf16.mxu0 0
          %1172 = vmatmul.mubr.bf16.gmra.mxu0 %v1057
          %v1173 = vpop.f32.mrf.mxu0
          %v1174 = vadd.f32 %v1045, %v1173
          %v1175 = vpop.f32.mrf.mxu0
          %v1176 = vadd.f32 %v1047, %v1175
          %v1177 = vpop.f32.mrf.mxu0
          %v1178 = vadd.f32 %v1049, %v1177
          %v1179 = vpop.f32.mrf.mxu0
          %v1180 = vadd.f32 %v1051, %v1179
          %1181 = vdwg.mxu0
          %v1182 = vxor.u32 %v1174, 2147483648
          %v1183 = vxor.u32 %v1178, 2147483648
          %v1184 = vmul.f32 %v1182, 1.442695
          %v1185 = vpow.pop %v1184
          %v1186 = vmul.f32 %v1183, 1.442695
          %v1187 = vpow.pop %v1186
          %v1188 = vadd.f32 %v1185, 1.0
          %v1189 = vadd.f32 %v1187, 1.0
          %v1190 = vrcp.pop %v1188
          %v1191 = vmul.f32 1.0, %v1190
          %v1192 = vrcp.pop %v1189
          %v1193 = vmul.f32 1.0, %v1192
          %v1194 = vmul.f32 %v1174, %v1191
          %v1195 = vmul.f32 %v1178, %v1193
          %v1196 = vmul.f32 %v1194, %v1176
          %v1197 = vmul.f32 %v1195, %v1180
          %v1198 = vpack.c.bf16 %v1197, %v1196
          %v1199 = vld [vmem:[#allocation16] sm:$0xff]
          %v1200 = vld [vmem:[#allocation16 + $0x8] sm:$0xff]
          %v1201 = vld [vmem:[%s752] sm:$0xf]
          %v1202 = vld [vmem:[%s752 + $0x4] sm:$0xf]
          %v1203 = vld [vmem:[%s752 + $0x8] sm:$0xf]
          %v1204 = vld [vmem:[%s752 + $0xc] sm:$0xf]
          %v1205 = vld [vmem:[%s752 + $0x10] sm:$0xf]
          %v1206 = vld [vmem:[%s752 + $0x14] sm:$0xf]
          %v1207 = vld [vmem:[%s752 + $0x18] sm:$0xf]
          %v1208 = vld [vmem:[%s752 + $0x1c] sm:$0xf]
          %v1209 = vld [vmem:[%s752 + $0x20] sm:$0xf]
          %v1210 = vld [vmem:[%s752 + $0x24] sm:$0xf]
          %v1211 = vld [vmem:[%s752 + $0x28] sm:$0xf]
          %v1212 = vld [vmem:[%s752 + $0x2c] sm:$0xf]
          %v1213 = vld [vmem:[%s752 + $0x30] sm:$0xf]
          %v1214 = vld [vmem:[%s752 + $0x34] sm:$0xf]
          %v1215 = vld [vmem:[%s752 + $0x38] sm:$0xf]
          %v1216 = vld [vmem:[%s752 + $0x3c] sm:$0xf]
          %v1233 = vunpack.c.l.b16 %v1201
          %v1234 = vunpack.c.l.b16 %v1202
          %v1235 = vunpack.c.l.b16 %v1203
          %v1236 = vunpack.c.l.b16 %v1204
          %v1237 = vunpack.c.l.b16 %v1205
          %v1238 = vunpack.c.l.b16 %v1206
          %v1239 = vunpack.c.l.b16 %v1207
          %v1240 = vunpack.c.l.b16 %v1208
          %v1241 = vunpack.c.l.b16 %v1209
          %v1242 = vunpack.c.l.b16 %v1210
          %v1243 = vunpack.c.l.b16 %v1211
          %v1244 = vunpack.c.l.b16 %v1212
          %v1245 = vunpack.c.l.b16 %v1213
          %v1246 = vunpack.c.l.b16 %v1214
          %v1247 = vunpack.c.l.b16 %v1215
          %v1248 = vunpack.c.l.b16 %v1216
          %v1249 = vpack.c.b16 %v1234, %v1233
          %v1250 = vpack.c.b16 %v1236, %v1235
          %v1251 = vpack.c.b16 %v1238, %v1237
          %v1252 = vpack.c.b16 %v1240, %v1239
          %v1253 = vpack.c.b16 %v1242, %v1241
          %v1254 = vpack.c.b16 %v1244, %v1243
          %v1255 = vpack.c.b16 %v1246, %v1245
          %v1256 = vpack.c.b16 %v1248, %v1247
          %1265 = vmatprep.subr.bf16.mxu0 0
          %1266 = vmatpush1.bf16.msra.mxu0 %v1256
          %1267 = vmatprep.subr.bf16.mxu0 0
          %1268 = vmatpush1.bf16.msra.mxu0 %v1255
          %1269 = vmatprep.subr.bf16.mxu0 0
          %1270 = vmatpush1.bf16.msra.mxu0 %v1254
          %1271 = vmatprep.subr.bf16.mxu0 0
          %1272 = vmatpush1.bf16.msra.mxu0 %v1253
          %1273 = vmatprep.subr.bf16.mxu0 0
          %1274 = vmatpush1.bf16.msra.mxu0 %v1252
          %1275 = vmatprep.subr.bf16.mxu0 0
          %1276 = vmatpush1.bf16.msra.mxu0 %v1251
          %1277 = vmatprep.subr.bf16.mxu0 0
          %1278 = vmatpush1.bf16.msra.mxu0 %v1250
          %1279 = vmatprep.subr.bf16.mxu0 0
          %1280 = vmatpush1.bf16.msra.mxu0 %v1249
          %1281 = vmatprep.subr.bf16.mxu0 0
          %1282 = vmatpush2.bf16.msra.mxu0 0
          %1283 = vmatprep.subr.bf16.mxu0 0
          %1284 = vmatpush2.bf16.msra.mxu0 0
          %1285 = vmatprep.subr.bf16.mxu0 0
          %1286 = vmatpush2.bf16.msra.mxu0 0
          %1287 = vmatprep.subr.bf16.mxu0 0
          %1288 = vmatpush2.bf16.msra.mxu0 0
          %1289 = vmatprep.subr.bf16.mxu0 0
          %1290 = vmatpush2.bf16.msra.mxu0 0
          %1291 = vmatprep.subr.bf16.mxu0 0
          %1292 = vmatpush2.bf16.msra.mxu0 0
          %1293 = vmatprep.subr.bf16.mxu0 0
          %1294 = vmatpush2.bf16.msra.mxu0 0
          %1295 = vmatprep.subr.bf16.mxu0 0
          %1296 = vmatpush2.bf16.msra.mxu0 0
          %1297 = vmatprep.mubr.bf16.mxu0 0
          %1298 = vmatmul.mubr.bf16.gmra.mxu0 %v1198
          %v1299 = vpop.f32.mrf.mxu0
          %v1300 = vadd.f32 0.0, %v1299
          %v1301 = vpop.f32.mrf.mxu0
          %v1302 = vpop.f32.mrf.mxu0
          %v1303 = vadd.f32 0.0, %v1302
          %v1304 = vpop.f32.mrf.mxu0
          %1305 = vdwg.mxu0
          %1307 = vset.pattern.permute.xlu0 0
          %1308 = vperm.xlu0 %1307, %v779
          %v1309 = vpop.permute.xlu0 %1308
          %1312 = vset.pattern.permute.xlu0 0
          %1313 = vperm.xlu0 %1312, %v780
          %v1314 = vpop.permute.xlu0 %1313
          %v1316 = vmul.f32 %v1309, %v1300
          %v1317 = vmul.f32 %v1314, %v1303
          %v1318 = vadd.f32 %v1199, %v1316
          %v1319 = vadd.f32 %v1200, %v1317
          %1320 = vst [vmem:[#allocation16] sm:$0xff] %v1318
          %1321 = vst [vmem:[#allocation16 + $0x8] sm:$0xff] %v1319
          %v1322 = vld [vmem:[#allocation4] sm:$0xff]
          %v1323 = vld [vmem:[#allocation4 + $0x8] sm:$0xff]
          %v1324 = vld [vmem:[%s762] sm:$0xf]
          %v1325 = vld [vmem:[%s762 + $0x4] sm:$0xf]
          %v1326 = vld [vmem:[%s762 + $0x8] sm:$0xf]
          %v1327 = vld [vmem:[%s762 + $0xc] sm:$0xf]
          %v1328 = vld [vmem:[%s762 + $0x10] sm:$0xf]
          %v1329 = vld [vmem:[%s762 + $0x14] sm:$0xf]
          %v1330 = vld [vmem:[%s762 + $0x18] sm:$0xf]
          %v1331 = vld [vmem:[%s762 + $0x1c] sm:$0xf]
          %v1332 = vld [vmem:[%s762 + $0x20] sm:$0xf]
          %v1333 = vld [vmem:[%s762 + $0x24] sm:$0xf]
          %v1334 = vld [vmem:[%s762 + $0x28] sm:$0xf]
          %v1335 = vld [vmem:[%s762 + $0x2c] sm:$0xf]
          %v1336 = vld [vmem:[%s762 + $0x30] sm:$0xf]
          %v1337 = vld [vmem:[%s762 + $0x34] sm:$0xf]
          %v1338 = vld [vmem:[%s762 + $0x38] sm:$0xf]
          %v1339 = vld [vmem:[%s762 + $0x3c] sm:$0xf]
          %v1356 = vunpack.c.l.b16 %v1324
          %v1357 = vunpack.c.l.b16 %v1325
          %v1358 = vunpack.c.l.b16 %v1326
          %v1359 = vunpack.c.l.b16 %v1327
          %v1360 = vunpack.c.l.b16 %v1328
          %v1361 = vunpack.c.l.b16 %v1329
          %v1362 = vunpack.c.l.b16 %v1330
          %v1363 = vunpack.c.l.b16 %v1331
          %v1364 = vunpack.c.l.b16 %v1332
          %v1365 = vunpack.c.l.b16 %v1333
          %v1366 = vunpack.c.l.b16 %v1334
          %v1367 = vunpack.c.l.b16 %v1335
          %v1368 = vunpack.c.l.b16 %v1336
          %v1369 = vunpack.c.l.b16 %v1337
          %v1370 = vunpack.c.l.b16 %v1338
          %v1371 = vunpack.c.l.b16 %v1339
          %v1372 = vpack.c.b16 %v1357, %v1356
          %v1373 = vpack.c.b16 %v1359, %v1358
          %v1374 = vpack.c.b16 %v1361, %v1360
          %v1375 = vpack.c.b16 %v1363, %v1362
          %v1376 = vpack.c.b16 %v1365, %v1364
          %v1377 = vpack.c.b16 %v1367, %v1366
          %v1378 = vpack.c.b16 %v1369, %v1368
          %v1379 = vpack.c.b16 %v1371, %v1370
          %1388 = vmatprep.subr.bf16.mxu0 0
          %1389 = vmatpush1.bf16.msra.mxu0 %v1379
          %1390 = vmatprep.subr.bf16.mxu0 0
          %1391 = vmatpush1.bf16.msra.mxu0 %v1378
          %1392 = vmatprep.subr.bf16.mxu0 0
          %1393 = vmatpush1.bf16.msra.mxu0 %v1377
          %1394 = vmatprep.subr.bf16.mxu0 0
          %1395 = vmatpush1.bf16.msra.mxu0 %v1376
          %1396 = vmatprep.subr.bf16.mxu0 0
          %1397 = vmatpush1.bf16.msra.mxu0 %v1375
          %1398 = vmatprep.subr.bf16.mxu0 0
          %1399 = vmatpush1.bf16.msra.mxu0 %v1374
          %1400 = vmatprep.subr.bf16.mxu0 0
          %1401 = vmatpush1.bf16.msra.mxu0 %v1373
          %1402 = vmatprep.subr.bf16.mxu0 0
          %1403 = vmatpush1.bf16.msra.mxu0 %v1372
          %1404 = vmatprep.subr.bf16.mxu0 0
          %1405 = vmatpush2.bf16.msra.mxu0 0
          %1406 = vmatprep.subr.bf16.mxu0 0
          %1407 = vmatpush2.bf16.msra.mxu0 0
          %1408 = vmatprep.subr.bf16.mxu0 0
          %1409 = vmatpush2.bf16.msra.mxu0 0
          %1410 = vmatprep.subr.bf16.mxu0 0
          %1411 = vmatpush2.bf16.msra.mxu0 0
          %1412 = vmatprep.subr.bf16.mxu0 0
          %1413 = vmatpush2.bf16.msra.mxu0 0
          %1414 = vmatprep.subr.bf16.mxu0 0
          %1415 = vmatpush2.bf16.msra.mxu0 0
          %1416 = vmatprep.subr.bf16.mxu0 0
          %1417 = vmatpush2.bf16.msra.mxu0 0
          %1418 = vmatprep.subr.bf16.mxu0 0
          %1419 = vmatpush2.bf16.msra.mxu0 0
          %1420 = vmatprep.mubr.bf16.mxu0 0
          %1421 = vmatmul.mubr.bf16.gmra.mxu0 %v1198
          %v1422 = vpop.f32.mrf.mxu0
          %v1423 = vadd.f32 0.0, %v1422
          %v1424 = vpop.f32.mrf.mxu0
          %v1425 = vpop.f32.mrf.mxu0
          %v1426 = vadd.f32 0.0, %v1425
          %v1427 = vpop.f32.mrf.mxu0
          %1428 = vdwg.mxu0
          %v1429 = vadd.f32 %v1322, %v1423
          %v1430 = vadd.f32 %v1323, %v1426
          %vm1431 = vcmask 130048
          %1432 = vst.msk [vmem:[#allocation4] sm:$0xff] %vm1431, %v1429
          %1433 = vst.msk [vmem:[#allocation4 + $0x8] sm:$0xff] %vm1431, %v1430
          // Predicated region
          $region97: #{tpu_custom_call.1} parent=91 // pred_check
            %p1434 = pneg %p767
          $region98: #{tpu_custom_call.1} parent=91 // pred_check_branch
            %1436 = sbr.rel (%p1434) target = $region100
          $region99: #{tpu_custom_call.1} parent=91 // pred_region
            %v1437 = vld [vmem:[%s582] sm:$0xff]
            %v1438 = vld [vmem:[%s582 + $0x8] sm:$0xff]
            %v1439 = vld [vmem:[#allocation4] sm:$0xff]
            %v1440 = vld [vmem:[#allocation4 + $0x8] sm:$0xff]
            %v1441 = vmul.f32 %v1439, %v1437
            %v1442 = vmul.f32 %v1440, %v1438
            %v1443 = vpack.c.bf16 %v1442, %v1441
            %v1444 = vld [vmem:[#allocation16] sm:$0xff]
            %v1445 = vld [vmem:[#allocation16 + $0x8] sm:$0xff]
            %v1446 = vld [vmem:[%s608] sm:$0xf]
            %v1447 = vld [vmem:[%s608 + $0x4] sm:$0xf]
            %v1450 = vunpack.c.l.b16 %v1446
            %v1451 = vunpack.c.l.b16 %v1447
            %v1452 = vpack.c.b16 %v1451, %v1450
            %v1455 = vsel %vm1431, %v1443, 0
            %1457 = vmatprep.subr.bf16.mxu0 0
            %1458 = vmatpush1.bf16.msra.mxu0 0
            %1459 = vmatprep.subr.bf16.mxu0 0
            %1460 = vmatpush1.bf16.msra.mxu0 0
            %1461 = vmatprep.subr.bf16.mxu0 0
            %1462 = vmatpush1.bf16.msra.mxu0 0
            %1463 = vmatprep.subr.bf16.mxu0 0
            %1464 = vmatpush1.bf16.msra.mxu0 0
            %1465 = vmatprep.subr.bf16.mxu0 0
            %1466 = vmatpush1.bf16.msra.mxu0 0
            %1467 = vmatprep.subr.bf16.mxu0 0
            %1468 = vmatpush1.bf16.msra.mxu0 0
            %1469 = vmatprep.subr.bf16.mxu0 0
            %1470 = vmatpush1.bf16.msra.mxu0 0
            %1471 = vmatprep.subr.bf16.mxu0 0
            %1472 = vmatpush1.bf16.msra.mxu0 %v1452
            %1473 = vmatprep.subr.bf16.mxu0 0
            %1474 = vmatpush2.bf16.msra.mxu0 0
            %1475 = vmatprep.subr.bf16.mxu0 0
            %1476 = vmatpush2.bf16.msra.mxu0 0
            %1477 = vmatprep.subr.bf16.mxu0 0
            %1478 = vmatpush2.bf16.msra.mxu0 0
            %1479 = vmatprep.subr.bf16.mxu0 0
            %1480 = vmatpush2.bf16.msra.mxu0 0
            %1481 = vmatprep.subr.bf16.mxu0 0
            %1482 = vmatpush2.bf16.msra.mxu0 0
            %1483 = vmatprep.subr.bf16.mxu0 0
            %1484 = vmatpush2.bf16.msra.mxu0 0
            %1485 = vmatprep.subr.bf16.mxu0 0
            %1486 = vmatpush2.bf16.msra.mxu0 0
            %1487 = vmatprep.subr.bf16.mxu0 0
            %1488 = vmatpush2.bf16.msra.mxu0 0
            %1489 = vmatprep.mubr.bf16.mxu0 0
            %1490 = vmatmul.mubr.bf16.gmra.mxu0 %v1455
            %v1491 = vpop.f32.mrf.mxu0
            %v1492 = vadd.f32 0.0, %v1491
            %v1493 = vpop.f32.mrf.mxu0
            %v1494 = vpop.f32.mrf.mxu0
            %v1495 = vadd.f32 0.0, %v1494
            %v1496 = vpop.f32.mrf.mxu0
            %1497 = vdwg.mxu0
            %v1498 = vmul.f32 %v1309, %v1492
            %v1499 = vmul.f32 %v1314, %v1495
            %v1500 = vadd.f32 %v1444, %v1498
            %v1501 = vadd.f32 %v1445, %v1499
            %1502 = vst [vmem:[#allocation16] sm:$0xff] %v1500
            %1503 = vst [vmem:[#allocation16 + $0x8] sm:$0xff] %v1501
          $region100: #{tpu_custom_call.1} parent=91 // pred_fallthru
            _
        $region92: #{tpu_custom_call.1} parent=63 // pred_fallthru
          _
        // Predicated region
        $region101: #{tpu_custom_call.1} parent=63 // pred_check
          %p1504 = pneg %p372
        $region102: #{tpu_custom_call.1} parent=63 // pred_check_branch
          %1506 = sbr.rel (%p1504) target = $region104
        $region103: #{tpu_custom_call.1} parent=63 // pred_region
          %s1507 = smul.u32 2, %s40
          %s1509 = ssub.s32 256, 256
          %1510 = vsyncadd [#allocation9], %s1509
          %s1511 = smul.addr %s1507, 128
          %s1512 = scalar_lea.hbm %s12, %s1511
          %s1513 = sshll.u32 [#allocation16], 4
          %s1514 = int_to_ptr.vmem [resolvable:$true] %s1513
          %1519 = dma.vmem_to_hbm [thread:$0]  %s1514, 256, %s1512, [#allocation9], 128, 128, 8
        $region104: #{tpu_custom_call.1} parent=63 // pred_fallthru
          _
        // Predicated region
        $region105: #{tpu_custom_call.1} parent=63 // pred_check
          %p1520 = pneg %p372
        $region106: #{tpu_custom_call.1} parent=63 // pred_check_branch
          %1522 = sbr.rel (%p1520) target = $region108
        $region107: #{tpu_custom_call.1} parent=63 // pred_region
          %1523 = dma.done [#allocation9], 256
        $region108: #{tpu_custom_call.1} parent=63 // pred_fallthru
          _
      $region64: #{tpu_custom_call.1} parent=5 // pred_fallthru
        _
      %p1524 = scmp.le.s32.totalorder 2, %s30
      // Predicated region
      $region109: #{tpu_custom_call.1} parent=5 // pred_check
        %p1525 = pneg %p1524
      $region110: #{tpu_custom_call.1} parent=5 // pred_check_branch
        %1527 = sbr.rel (%p1525) target = $region112
      $region111: #{tpu_custom_call.1} parent=5 // pred_region
        %s1528 = ssub.s32 %s30, 2
      $region112: #{tpu_custom_call.1} parent=5 // pred_fallthru
        _
    $region6: #{tpu_custom_call.1} parent=1 // loop_footer
      %s34 = sadd.s32 1, %s30
    $region7: #{tpu_custom_call.1} parent=1 // loop_footer_branch
      %29 = sbr.rel target = $region3
    $region8: #{tpu_custom_call.1} parent=1 // loop_exit
      _
    %1529 = vsyncpa [#allocation8], 1
    %s1530 = scalar_lea.sflag [#allocation8], 1
    %1531 = vsyncpa %s1530, 1
    %1532 = vsyncpa [#allocation11], 1
    %s1533 = scalar_lea.sflag [#allocation11], 1
    %1534 = vsyncpa %s1533, 1
    %1535 = vsyncpa [#allocation14], 1
    %s1536 = scalar_lea.sflag [#allocation14], 1
    %1537 = vsyncpa %s1536, 1
    %1538 = vsyncpa [#allocation9], 1
    %s1539 = scalar_lea.sflag [#allocation9], 1
    %1540 = vsyncpa %s1539, 1

</llo_original>
